<compile_context>
chip_gen: v6e
topology: v6e:2x2x1
jax: 0.10.0
libtpu: 0.0.40
codegen_flags: <defaults>
</compile_context>

<pallas_src>
import math

import jax
import jax.numpy as jnp
from jax.experimental import pallas as pl
from jax.experimental.pallas import tpu as pltpu


# ----------------------------------------------------------------------------- helpers
def _gelu_tanh(x):
    c0 = math.sqrt(2.0 / math.pi)
    return 0.5 * x * (1.0 + jnp.tanh(c0 * (x + 0.044715 * x * x * x)))


def _replicated_spec(shape):
    """BlockSpec for a weight that is identical for every grid step."""
    nd = len(shape)
    return pl.BlockSpec(shape, lambda b, s, nd=nd: (0,) * nd)


def drop_path_scale(key, batch, drop_prob):
    """Per-sample stochastic-depth scale, hoisted out of the kernel.

    scale[b] = floor(keep_prob + U[0,1)) / keep_prob   (timm drop_path semantics)
    """
    if drop_prob is None or drop_prob <= 0.0:
        return jnp.ones((batch,), jnp.float32)
    assert drop_prob < 1.0, "drop_prob == 1.0 makes keep_prob == 0 (division by zero)"
    keep = 1.0 - float(drop_prob)
    u = jax.random.uniform(key, (batch,), dtype=jnp.float32)
    return jnp.floor(keep + u) * (1.0 / keep)


# ----------------------------------------------------------------------------- params
def init_block_params(key, dim, num_heads, mlp_ratio=4.0, qkv_bias=False,
                      init_values=None, attn_head_dim=None):
    head_dim = dim // num_heads if attn_head_dim is None else attn_head_dim
    all_head = head_dim * num_heads
    hidden = int(dim * mlp_ratio)
    ks = jax.random.split(key, 12)

    def dense(k, fan_in, shape):
        return jax.random.normal(k, shape, jnp.float32) / math.sqrt(fan_in)

    gamma = None
    if init_values is not None and init_values > 0:
        gamma = init_values * jnp.ones((dim,), jnp.float32)

    return {
        "ln1_w": 1.0 + 0.1 * jax.random.normal(ks[0], (dim,), jnp.float32),
        "ln1_b": 0.1 * jax.random.normal(ks[1], (dim,), jnp.float32),
        "ln2_w": 1.0 + 0.1 * jax.random.normal(ks[2], (dim,), jnp.float32),
        "ln2_b": 0.1 * jax.random.normal(ks[3], (dim,), jnp.float32),
        # stored as (in, out) so the kernels compute h @ W (PyTorch stores W^T)
        "wqkv": dense(ks[4], dim, (dim, 3 * all_head)),
        "q_bias": 0.02 * jax.random.normal(ks[5], (all_head,), jnp.float32) if qkv_bias else None,
        "v_bias": 0.02 * jax.random.normal(ks[6], (all_head,), jnp.float32) if qkv_bias else None,
        "wproj": dense(ks[7], all_head, (all_head, dim)),
        "bproj": 0.02 * jax.random.normal(ks[8], (dim,), jnp.float32),
        "w1": dense(ks[9], dim, (dim, hidden)),
        "b1": 0.02 * jax.random.normal(ks[10], (hidden,), jnp.float32),
        "w2": dense(ks[11], hidden, (hidden, dim)),
        "b2": jnp.zeros((dim,), jnp.float32),
        "gamma1": gamma,
        "gamma2": gamma,
    }


# ----------------------------------------------------------------------------- attention branch kernel
def _attn_residual_branch(x, dp_scale, params, *, num_heads, head_dim, attn_scale):
    """out = x + dp_scale * (gamma_1 * Attention(LN1(x)))   (one fused Pallas kernel)."""
    B, N, D = x.shape
    H, hd = num_heads, head_dim
    A = H * hd

    # Wrapper-side layout plumbing (pure XLA reshapes of the small weights).
    wqkv = params["wqkv"]                                   # (D, 3A)

    def split_heads(w):                                     # (D, A) -> (H, D, hd)
        return w.reshape(D, H, hd).transpose(1, 0, 2)

    wq = split_heads(wqkv[:, 0 * A:1 * A])
    wk = split_heads(wqkv[:, 1 * A:2 * A])
    wv = split_heads(wqkv[:, 2 * A:3 * A])
    zeros_b = jnp.zeros((H, 1, hd), x.dtype)
    bq = params["q_bias"].reshape(H, 1, hd) if params["q_bias"] is not None else zeros_b
    bv = params["v_bias"].reshape(H, 1, hd) if params["v_bias"] is not None else zeros_b
    bk = zeros_b                                            # k bias is always zero in the module
    wo = params["wproj"].reshape(H, hd, D)
    bo = params["bproj"].reshape(1, D)
    lnw = params["ln1_w"].reshape(1, D)
    lnb = params["ln1_b"].reshape(1, D)
    g1 = params["gamma1"] if params["gamma1"] is not None else jnp.ones((D,), x.dtype)
    g1 = g1.reshape(1, D)

    def kernel(s_ref, x_ref, lnw_ref, lnb_ref, wq_ref, bq_ref, wk_ref, bk_ref,
               wv_ref, bv_ref, wo_ref, bo_ref, g_ref, o_ref):
        b = pl.program_id(0)
        dp = s_ref[b]                                       # per-sample DropPath scale (SMEM)
        xv = x_ref[...]                                     # (N, D)

        # LayerNorm (norm1)
        mu = jnp.mean(xv, axis=-1, keepdims=True)
        var = jnp.mean(jnp.square(xv - mu), axis=-1, keepdims=True)
        h = (xv - mu) * jax.lax.rsqrt(var + 1e-5)
        h = h * lnw_ref[...] + lnb_ref[...]

        # Multi-head self-attention, heads statically unrolled; the proj matmul is
        # accumulated per head so no in-kernel concat/lane-slicing is needed.
        acc = None
        for hh in range(H):
            qh = jnp.dot(h, wq_ref[hh], preferred_element_type=jnp.float32) + bq_ref[hh]
            kh = jnp.dot(h, wk_ref[hh], preferred_element_type=jnp.float32) + bk_ref[hh]
            vh = jnp.dot(h, wv_ref[hh], preferred_element_type=jnp.float32) + bv_ref[hh]
            s = jax.lax.dot_general(qh * attn_scale, kh,
                                    dimension_numbers=(((1,), (1,)), ((), ())),
                                    preferred_element_type=jnp.float32)      # (N, N)
            s = s - jnp.max(s, axis=-1, keepdims=True)
            e = jnp.exp(s)
            pa = e / jnp.sum(e, axis=-1, keepdims=True)
            ctx = jnp.dot(pa, vh, preferred_element_type=jnp.float32)        # (N, hd)
            contrib = jnp.dot(ctx, wo_ref[hh], preferred_element_type=jnp.float32)
            acc = contrib if acc is None else acc + contrib

        y = (acc + bo_ref[...]) * g_ref[...]
        # Fused DropPath + residual add (scale math hoisted to the wrapper).
        o_ref[...] = (xv + dp * y).astype(o_ref.dtype)

    grid_spec = pltpu.PrefetchScalarGridSpec(
        num_scalar_prefetch=1,
        grid=(B,),
        in_specs=[
            pl.BlockSpec((None, N, D), lambda b, s: (b, 0, 0)),
            _replicated_spec((1, D)), _replicated_spec((1, D)),
            _replicated_spec((H, D, hd)), _replicated_spec((H, 1, hd)),
            _replicated_spec((H, D, hd)), _replicated_spec((H, 1, hd)),
            _replicated_spec((H, D, hd)), _replicated_spec((H, 1, hd)),
            _replicated_spec((H, hd, D)), _replicated_spec((1, D)),
            _replicated_spec((1, D)),
        ],
        out_specs=pl.BlockSpec((None, N, D), lambda b, s: (b, 0, 0)),
    )

    return pl.pallas_call(
        kernel,
        out_shape=jax.ShapeDtypeStruct((B, N, D), x.dtype),
        grid_spec=grid_spec,
        compiler_params=pltpu.CompilerParams(
            dimension_semantics=("parallel",),   # samples independent -> megacore on v7x
        ),
    )(dp_scale, x, lnw, lnb, wq, bq, wk, bk, wv, bv, wo, bo, g1)


# ----------------------------------------------------------------------------- MLP branch kernel
def _mlp_residual_branch(x, dp_scale, params):
    """out = x + dp_scale * (gamma_2 * MLP(LN2(x)))   (one fused Pallas kernel)."""
    B, N, D = x.shape
    Dh = params["w1"].shape[1]
    lnw = params["ln2_w"].reshape(1, D)
    lnb = params["ln2_b"].reshape(1, D)
    w1 = params["w1"]
    b1 = params["b1"].reshape(1, Dh)
    w2 = params["w2"]
    b2 = params["b2"].reshape(1, D)
    g2 = params["gamma2"] if params["gamma2"] is not None else jnp.ones((D,), x.dtype)
    g2 = g2.reshape(1, D)

    def kernel(s_ref, x_ref, lnw_ref, lnb_ref, w1_ref, b1_ref, w2_ref, b2_ref, g_ref, o_ref):
        b = pl.program_id(0)
        dp = s_ref[b]
        xv = x_ref[...]                                     # (N, D)
        mu = jnp.mean(xv, axis=-1, keepdims=True)
        var = jnp.mean(jnp.square(xv - mu), axis=-1, keepdims=True)
        h = (xv - mu) * jax.lax.rsqrt(var + 1e-5)
        h = h * lnw_ref[...] + lnb_ref[...]
        a = jnp.dot(h, w1_ref[...], preferred_element_type=jnp.float32) + b1_ref[...]
        a = _gelu_tanh(a)
        y = jnp.dot(a, w2_ref[...], preferred_element_type=jnp.float32) + b2_ref[...]
        y = y * g_ref[...]
        o_ref[...] = (xv + dp * y).astype(o_ref.dtype)

    grid_spec = pltpu.PrefetchScalarGridSpec(
        num_scalar_prefetch=1,
        grid=(B,),
        in_specs=[
            pl.BlockSpec((None, N, D), lambda b, s: (b, 0, 0)),
            _replicated_spec((1, D)), _replicated_spec((1, D)),
            _replicated_spec((D, Dh)), _replicated_spec((1, Dh)),
            _replicated_spec((Dh, D)), _replicated_spec((1, D)),
            _replicated_spec((1, D)),
        ],
        out_specs=pl.BlockSpec((None, N, D), lambda b, s: (b, 0, 0)),
    )

    return pl.pallas_call(
        kernel,
        out_shape=jax.ShapeDtypeStruct((B, N, D), x.dtype),
        grid_spec=grid_spec,
        compiler_params=pltpu.CompilerParams(
            dimension_semantics=("parallel",),
        ),
    )(dp_scale, x, lnw, lnb, w1, b1, w2, b2, g2)


# ----------------------------------------------------------------------------- Block forward
def block_forward_pallas(params, x, dp_scale1, dp_scale2, *, num_heads, head_dim,
                         attn_scale, mask=None):
    if mask is not None:
        # TODO(synk): windowed attention mask (nW, N, N) add-before-softmax not implemented.
        raise NotImplementedError("attention mask is not supported in the Pallas path")
    x = _attn_residual_branch(x, dp_scale1, params, num_heads=num_heads,
                              head_dim=head_dim, attn_scale=attn_scale)
    x = _mlp_residual_branch(x, dp_scale2, params)
    return x


# ----------------------------------------------------------------------------- pure-JAX reference
def _layernorm_ref(x, w, b, eps=1e-5):
    mu = jnp.mean(x, axis=-1, keepdims=True)
    var = jnp.mean(jnp.square(x - mu), axis=-1, keepdims=True)
    return (x - mu) * jax.lax.rsqrt(var + eps) * w + b


def block_forward_reference(params, x, s1, s2, *, num_heads, head_dim, attn_scale):
    B, N, D = x.shape
    H, hd = num_heads, head_dim
    A = H * hd
    # attention branch (mirrors PyTorch Attention.forward with mask=None, fused weights)
    h = _layernorm_ref(x, params["ln1_w"], params["ln1_b"])
    if params["q_bias"] is not None:
        bqkv = jnp.concatenate([params["q_bias"],
                                jnp.zeros_like(params["v_bias"]),
                                params["v_bias"]])
    else:
        bqkv = jnp.zeros((3 * A,), x.dtype)
    qkv = h @ params["wqkv"] + bqkv
    qkv = qkv.reshape(B, N, 3, H, hd).transpose(2, 0, 3, 1, 4)
    q, k, v = qkv[0], qkv[1], qkv[2]
    attn = jnp.einsum("bhnk,bhmk->bhnm", q * attn_scale, k)
    attn = jax.nn.softmax(attn, axis=-1)
    ctx = jnp.einsum("bhnm,bhmk->bhnk", attn, v)
    ctx = ctx.transpose(0, 2, 1, 3).reshape(B, N, A)
    y = ctx @ params["wproj"] + params["bproj"]
    if params["gamma1"] is not None:
        y = y * params["gamma1"]
    x = x + s1[:, None, None] * y
    # MLP branch
    h = _layernorm_ref(x, params["ln2_w"], params["ln2_b"])
    a = _gelu_tanh(h @ params["w1"] + params["b1"])
    y = a @ params["w2"] + params["b2"]
    if params["gamma2"] is not None:
        y = y * params["gamma2"]
    x = x + s2[:, None, None] * y
    return x


# ----------------------------------------------------------------------------- demo / check
if __name__ == "__main__":
    root = jax.random.PRNGKey(0)
    k_param, k_x, k_dp = jax.random.split(root, 3)

    B, N, D = 2, 8, 32
    num_heads = 4
    head_dim = D // num_heads
    attn_scale = head_dim ** -0.5
    drop_path_prob = 0.5
    init_values = 0.1

    params = init_block_params(k_param, dim=D, num_heads=num_heads, mlp_ratio=4.0,
                               qkv_bias=True, init_values=init_values)
    x = jax.random.normal(k_x, (B, N, D), dtype=jnp.float32)

    # Training mode: stochastic depth active; per-sample scales drawn in the wrapper.
    k1, k2 = jax.random.split(k_dp)
    s1 = drop_path_scale(k1, B, drop_path_prob)
    s2 = drop_path_scale(k2, B, drop_path_prob)

    y = block_forward_pallas(params, x, s1, s2, num_heads=num_heads,
                             head_dim=head_dim, attn_scale=attn_scale)
    y = jax.block_until_ready(y)
    y_ref = block_forward_reference(params, x, s1, s2, num_heads=num_heads,
                                    head_dim=head_dim, attn_scale=attn_scale)
    assert y.shape == x.shape and y.dtype == x.dtype
    err = float(jnp.max(jnp.abs(y - y_ref)))
    assert jnp.allclose(y, y_ref, atol=2e-3, rtol=2e-3), f"train-mode mismatch, max|d|={err}"

    # Eval mode: DropPath is identity (scale == 1), matching the PyTorch short-circuit.
    ones = jnp.ones((B,), jnp.float32)
    y_eval = jax.block_until_ready(
        block_forward_pallas(params, x, ones, ones, num_heads=num_heads,
                             head_dim=head_dim, attn_scale=attn_scale))
    y_eval_ref = block_forward_reference(params, x, ones, ones, num_heads=num_heads,
                                         head_dim=head_dim, attn_scale=attn_scale)
    err_eval = float(jnp.max(jnp.abs(y_eval - y_eval_ref)))
    assert jnp.allclose(y_eval, y_eval_ref, atol=2e-3, rtol=2e-3), \
        f"eval-mode mismatch, max|d|={err_eval}"

    print("KERNEL_OK")
</pallas_src>

<mosaic_0001>
module attributes {stable_mosaic.version = 11 : i64} {
  func.func @kernel(%arg0: i32, %arg1: memref<2xf32, #tpu.memory_space<smem>>, %arg2: memref<1x8x32xf32, #tpu.memory_space<vmem>>, %arg3: memref<1x32xf32, #tpu.memory_space<vmem>>, %arg4: memref<1x32xf32, #tpu.memory_space<vmem>>, %arg5: memref<4x32x8xf32, #tpu.memory_space<vmem>>, %arg6: memref<4x1x8xf32, #tpu.memory_space<vmem>>, %arg7: memref<4x32x8xf32, #tpu.memory_space<vmem>>, %arg8: memref<4x1x8xf32, #tpu.memory_space<vmem>>, %arg9: memref<4x32x8xf32, #tpu.memory_space<vmem>>, %arg10: memref<4x1x8xf32, #tpu.memory_space<vmem>>, %arg11: memref<4x8x32xf32, #tpu.memory_space<vmem>>, %arg12: memref<1x32xf32, #tpu.memory_space<vmem>>, %arg13: memref<1x32xf32, #tpu.memory_space<vmem>>, %arg14: memref<1x8x32xf32, #tpu.memory_space<vmem>>) attributes {dimension_semantics = [#tpu.dimension_semantics<parallel>], iteration_bounds = array<i64: 2>, scalar_prefetch = 1 : i64, scratch_operands = 0 : i64, tpu.core_type = #tpu.core_type<tc>, window_params = [{transform_indices = @transform_0, window_bounds = array<i64: 1, 8, 32>}, {pipeline_mode = #tpu.pipeline_mode<synchronous>, transform_indices = @transform_1, window_bounds = array<i64: 1, 32>}, {pipeline_mode = #tpu.pipeline_mode<synchronous>, transform_indices = @transform_2, window_bounds = array<i64: 1, 32>}, {pipeline_mode = #tpu.pipeline_mode<synchronous>, transform_indices = @transform_3, window_bounds = array<i64: 4, 32, 8>}, {pipeline_mode = #tpu.pipeline_mode<synchronous>, transform_indices = @transform_4, window_bounds = array<i64: 4, 1, 8>}, {pipeline_mode = #tpu.pipeline_mode<synchronous>, transform_indices = @transform_5, window_bounds = array<i64: 4, 32, 8>}, {pipeline_mode = #tpu.pipeline_mode<synchronous>, transform_indices = @transform_6, window_bounds = array<i64: 4, 1, 8>}, {pipeline_mode = #tpu.pipeline_mode<synchronous>, transform_indices = @transform_7, window_bounds = array<i64: 4, 32, 8>}, {pipeline_mode = #tpu.pipeline_mode<synchronous>, transform_indices = @transform_8, window_bounds = array<i64: 4, 1, 8>}, {pipeline_mode = #tpu.pipeline_mode<synchronous>, transform_indices = @transform_9, window_bounds = array<i64: 4, 8, 32>}, {pipeline_mode = #tpu.pipeline_mode<synchronous>, transform_indices = @transform_10, window_bounds = array<i64: 1, 32>}, {pipeline_mode = #tpu.pipeline_mode<synchronous>, transform_indices = @transform_11, window_bounds = array<i64: 1, 32>}, {transform_indices = @transform_12, window_bounds = array<i64: 1, 8, 32>}]} {
    %0 = arith.index_cast %arg0 : i32 to index
    %1 = memref.load %arg1[%0] : memref<2xf32, #tpu.memory_space<smem>>
    %c0 = arith.constant 0 : index
    %c0_0 = arith.constant 0 : index
    %c0_1 = arith.constant 0 : index
    %2 = vector.load %arg2[%c0, %c0_0, %c0_1] : memref<1x8x32xf32, #tpu.memory_space<vmem>>, vector<1x8x32xf32>
    %3 = vector.shape_cast %2 : vector<1x8x32xf32> to vector<8x32xf32>
    %cst = arith.constant dense<0.000000e+00> : vector<8xf32>
    %4 = vector.multi_reduction <add>, %3, %cst [1] : vector<8x32xf32> to vector<8xf32>
    %5 = vector.shape_cast %4 : vector<8xf32> to vector<8x1xf32>
    %cst_2 = arith.constant 3.200000e+01 : f32
    %6 = vector.broadcast %cst_2 : f32 to vector<8x1xf32>
    %7 = arith.divf %5, %6 : vector<8x1xf32>
    %8 = vector.broadcast %7 : vector<8x1xf32> to vector<8x32xf32>
    %9 = arith.subf %3, %8 : vector<8x32xf32>
    %10 = arith.mulf %9, %9 : vector<8x32xf32>
    %cst_3 = arith.constant dense<0.000000e+00> : vector<8xf32>
    %11 = vector.multi_reduction <add>, %10, %cst_3 [1] : vector<8x32xf32> to vector<8xf32>
    %12 = vector.shape_cast %11 : vector<8xf32> to vector<8x1xf32>
    %cst_4 = arith.constant 3.200000e+01 : f32
    %13 = vector.broadcast %cst_4 : f32 to vector<8x1xf32>
    %14 = arith.divf %12, %13 : vector<8x1xf32>
    %15 = vector.broadcast %7 : vector<8x1xf32> to vector<8x32xf32>
    %16 = arith.subf %3, %15 : vector<8x32xf32>
    %cst_5 = arith.constant 9.99999974E-6 : f32
    %17 = vector.broadcast %cst_5 : f32 to vector<8x1xf32>
    %18 = arith.addf %14, %17 : vector<8x1xf32>
    %19 = math.rsqrt %18 : vector<8x1xf32>
    %20 = vector.broadcast %19 : vector<8x1xf32> to vector<8x32xf32>
    %21 = arith.mulf %16, %20 : vector<8x32xf32>
    %c0_6 = arith.constant 0 : index
    %c0_7 = arith.constant 0 : index
    %22 = vector.load %arg3[%c0_6, %c0_7] : memref<1x32xf32, #tpu.memory_space<vmem>>, vector<1x32xf32>
    %23 = vector.broadcast %22 : vector<1x32xf32> to vector<8x32xf32>
    %24 = arith.mulf %21, %23 : vector<8x32xf32>
    %c0_8 = arith.constant 0 : index
    %c0_9 = arith.constant 0 : index
    %25 = vector.load %arg4[%c0_8, %c0_9] : memref<1x32xf32, #tpu.memory_space<vmem>>, vector<1x32xf32>
    %26 = vector.broadcast %25 : vector<1x32xf32> to vector<8x32xf32>
    %27 = arith.addf %24, %26 : vector<8x32xf32>
    %c0_10 = arith.constant 0 : index
    %c0_11 = arith.constant 0 : index
    %c0_12 = arith.constant 0 : index
    %28 = vector.load %arg5[%c0_10, %c0_11, %c0_12] : memref<4x32x8xf32, #tpu.memory_space<vmem>>, vector<1x32x8xf32>
    %29 = vector.shape_cast %28 : vector<1x32x8xf32> to vector<32x8xf32>
    %cst_13 = arith.constant dense<0.000000e+00> : vector<8x8xf32>
    %30 = tpu.matmul %27, %29, %cst_13 {dimension_numbers = #tpu.dot_dimension_numbers<[1], [0], [0], [1], [0, 0, 1, 1], [], []>} : vector<8x32xf32>, vector<32x8xf32>, vector<8x8xf32> -> vector<8x8xf32>
    %c0_14 = arith.constant 0 : index
    %c0_15 = arith.constant 0 : index
    %c0_16 = arith.constant 0 : index
    %31 = vector.load %arg6[%c0_14, %c0_15, %c0_16] : memref<4x1x8xf32, #tpu.memory_space<vmem>>, vector<1x1x8xf32>
    %32 = vector.shape_cast %31 : vector<1x1x8xf32> to vector<1x8xf32>
    %33 = vector.broadcast %32 : vector<1x8xf32> to vector<8x8xf32>
    %34 = arith.addf %30, %33 : vector<8x8xf32>
    %c0_17 = arith.constant 0 : index
    %c0_18 = arith.constant 0 : index
    %c0_19 = arith.constant 0 : index
    %35 = vector.load %arg7[%c0_17, %c0_18, %c0_19] : memref<4x32x8xf32, #tpu.memory_space<vmem>>, vector<1x32x8xf32>
    %36 = vector.shape_cast %35 : vector<1x32x8xf32> to vector<32x8xf32>
    %cst_20 = arith.constant dense<0.000000e+00> : vector<8x8xf32>
    %37 = tpu.matmul %27, %36, %cst_20 {dimension_numbers = #tpu.dot_dimension_numbers<[1], [0], [0], [1], [0, 0, 1, 1], [], []>} : vector<8x32xf32>, vector<32x8xf32>, vector<8x8xf32> -> vector<8x8xf32>
    %c0_21 = arith.constant 0 : index
    %c0_22 = arith.constant 0 : index
    %c0_23 = arith.constant 0 : index
    %38 = vector.load %arg8[%c0_21, %c0_22, %c0_23] : memref<4x1x8xf32, #tpu.memory_space<vmem>>, vector<1x1x8xf32>
    %39 = vector.shape_cast %38 : vector<1x1x8xf32> to vector<1x8xf32>
    %40 = vector.broadcast %39 : vector<1x8xf32> to vector<8x8xf32>
    %41 = arith.addf %37, %40 : vector<8x8xf32>
    %c0_24 = arith.constant 0 : index
    %c0_25 = arith.constant 0 : index
    %c0_26 = arith.constant 0 : index
    %42 = vector.load %arg9[%c0_24, %c0_25, %c0_26] : memref<4x32x8xf32, #tpu.memory_space<vmem>>, vector<1x32x8xf32>
    %43 = vector.shape_cast %42 : vector<1x32x8xf32> to vector<32x8xf32>
    %cst_27 = arith.constant dense<0.000000e+00> : vector<8x8xf32>
    %44 = tpu.matmul %27, %43, %cst_27 {dimension_numbers = #tpu.dot_dimension_numbers<[1], [0], [0], [1], [0, 0, 1, 1], [], []>} : vector<8x32xf32>, vector<32x8xf32>, vector<8x8xf32> -> vector<8x8xf32>
    %c0_28 = arith.constant 0 : index
    %c0_29 = arith.constant 0 : index
    %c0_30 = arith.constant 0 : index
    %45 = vector.load %arg10[%c0_28, %c0_29, %c0_30] : memref<4x1x8xf32, #tpu.memory_space<vmem>>, vector<1x1x8xf32>
    %46 = vector.shape_cast %45 : vector<1x1x8xf32> to vector<1x8xf32>
    %47 = vector.broadcast %46 : vector<1x8xf32> to vector<8x8xf32>
    %48 = arith.addf %44, %47 : vector<8x8xf32>
    %cst_31 = arith.constant 0.353553385 : f32
    %49 = vector.broadcast %cst_31 : f32 to vector<8x8xf32>
    %50 = arith.mulf %34, %49 : vector<8x8xf32>
    %cst_32 = arith.constant dense<0.000000e+00> : vector<8x8xf32>
    %51 = tpu.matmul %50, %41, %cst_32 {dimension_numbers = #tpu.dot_dimension_numbers<[1], [1], [0], [0], [0, 0, 1, 0], [], []>} : vector<8x8xf32>, vector<8x8xf32>, vector<8x8xf32> -> vector<8x8xf32>
    %cst_33 = arith.constant dense<0xFF800000> : vector<8xf32>
    %52 = vector.multi_reduction <maximumf>, %51, %cst_33 [1] : vector<8x8xf32> to vector<8xf32>
    %53 = vector.shape_cast %52 : vector<8xf32> to vector<8x1xf32>
    %54 = vector.broadcast %53 : vector<8x1xf32> to vector<8x8xf32>
    %55 = arith.subf %51, %54 : vector<8x8xf32>
    %56 = math.exp %55 : vector<8x8xf32>
    %cst_34 = arith.constant dense<0.000000e+00> : vector<8xf32>
    %57 = vector.multi_reduction <add>, %56, %cst_34 [1] : vector<8x8xf32> to vector<8xf32>
    %58 = vector.shape_cast %57 : vector<8xf32> to vector<8x1xf32>
    %59 = vector.broadcast %58 : vector<8x1xf32> to vector<8x8xf32>
    %60 = arith.divf %56, %59 : vector<8x8xf32>
    %cst_35 = arith.constant dense<0.000000e+00> : vector<8x8xf32>
    %61 = tpu.matmul %60, %48, %cst_35 {dimension_numbers = #tpu.dot_dimension_numbers<[1], [0], [0], [1], [0, 0, 1, 1], [], []>} : vector<8x8xf32>, vector<8x8xf32>, vector<8x8xf32> -> vector<8x8xf32>
    %c0_36 = arith.constant 0 : index
    %c0_37 = arith.constant 0 : index
    %c0_38 = arith.constant 0 : index
    %62 = vector.load %arg11[%c0_36, %c0_37, %c0_38] : memref<4x8x32xf32, #tpu.memory_space<vmem>>, vector<1x8x32xf32>
    %63 = vector.shape_cast %62 : vector<1x8x32xf32> to vector<8x32xf32>
    %cst_39 = arith.constant dense<0.000000e+00> : vector<8x32xf32>
    %64 = tpu.matmul %61, %63, %cst_39 {dimension_numbers = #tpu.dot_dimension_numbers<[1], [0], [0], [1], [0, 0, 1, 1], [], []>} : vector<8x8xf32>, vector<8x32xf32>, vector<8x32xf32> -> vector<8x32xf32>
    %c1 = arith.constant 1 : index
    %c0_40 = arith.constant 0 : index
    %c0_41 = arith.constant 0 : index
    %65 = vector.load %arg5[%c1, %c0_40, %c0_41] : memref<4x32x8xf32, #tpu.memory_space<vmem>>, vector<1x32x8xf32>
    %66 = vector.shape_cast %65 : vector<1x32x8xf32> to vector<32x8xf32>
    %cst_42 = arith.constant dense<0.000000e+00> : vector<8x8xf32>
    %67 = tpu.matmul %27, %66, %cst_42 {dimension_numbers = #tpu.dot_dimension_numbers<[1], [0], [0], [1], [0, 0, 1, 1], [], []>} : vector<8x32xf32>, vector<32x8xf32>, vector<8x8xf32> -> vector<8x8xf32>
    %c1_43 = arith.constant 1 : index
    %c0_44 = arith.constant 0 : index
    %c0_45 = arith.constant 0 : index
    %68 = vector.load %arg6[%c1_43, %c0_44, %c0_45] : memref<4x1x8xf32, #tpu.memory_space<vmem>>, vector<1x1x8xf32>
    %69 = vector.shape_cast %68 : vector<1x1x8xf32> to vector<1x8xf32>
    %70 = vector.broadcast %69 : vector<1x8xf32> to vector<8x8xf32>
    %71 = arith.addf %67, %70 : vector<8x8xf32>
    %c1_46 = arith.constant 1 : index
    %c0_47 = arith.constant 0 : index
    %c0_48 = arith.constant 0 : index
    %72 = vector.load %arg7[%c1_46, %c0_47, %c0_48] : memref<4x32x8xf32, #tpu.memory_space<vmem>>, vector<1x32x8xf32>
    %73 = vector.shape_cast %72 : vector<1x32x8xf32> to vector<32x8xf32>
    %cst_49 = arith.constant dense<0.000000e+00> : vector<8x8xf32>
    %74 = tpu.matmul %27, %73, %cst_49 {dimension_numbers = #tpu.dot_dimension_numbers<[1], [0], [0], [1], [0, 0, 1, 1], [], []>} : vector<8x32xf32>, vector<32x8xf32>, vector<8x8xf32> -> vector<8x8xf32>
    %c1_50 = arith.constant 1 : index
    %c0_51 = arith.constant 0 : index
    %c0_52 = arith.constant 0 : index
    %75 = vector.load %arg8[%c1_50, %c0_51, %c0_52] : memref<4x1x8xf32, #tpu.memory_space<vmem>>, vector<1x1x8xf32>
    %76 = vector.shape_cast %75 : vector<1x1x8xf32> to vector<1x8xf32>
    %77 = vector.broadcast %76 : vector<1x8xf32> to vector<8x8xf32>
    %78 = arith.addf %74, %77 : vector<8x8xf32>
    %c1_53 = arith.constant 1 : index
    %c0_54 = arith.constant 0 : index
    %c0_55 = arith.constant 0 : index
    %79 = vector.load %arg9[%c1_53, %c0_54, %c0_55] : memref<4x32x8xf32, #tpu.memory_space<vmem>>, vector<1x32x8xf32>
    %80 = vector.shape_cast %79 : vector<1x32x8xf32> to vector<32x8xf32>
    %cst_56 = arith.constant dense<0.000000e+00> : vector<8x8xf32>
    %81 = tpu.matmul %27, %80, %cst_56 {dimension_numbers = #tpu.dot_dimension_numbers<[1], [0], [0], [1], [0, 0, 1, 1], [], []>} : vector<8x32xf32>, vector<32x8xf32>, vector<8x8xf32> -> vector<8x8xf32>
    %c1_57 = arith.constant 1 : index
    %c0_58 = arith.constant 0 : index
    %c0_59 = arith.constant 0 : index
    %82 = vector.load %arg10[%c1_57, %c0_58, %c0_59] : memref<4x1x8xf32, #tpu.memory_space<vmem>>, vector<1x1x8xf32>
    %83 = vector.shape_cast %82 : vector<1x1x8xf32> to vector<1x8xf32>
    %84 = vector.broadcast %83 : vector<1x8xf32> to vector<8x8xf32>
    %85 = arith.addf %81, %84 : vector<8x8xf32>
    %cst_60 = arith.constant 0.353553385 : f32
    %86 = vector.broadcast %cst_60 : f32 to vector<8x8xf32>
    %87 = arith.mulf %71, %86 : vector<8x8xf32>
    %cst_61 = arith.constant dense<0.000000e+00> : vector<8x8xf32>
    %88 = tpu.matmul %87, %78, %cst_61 {dimension_numbers = #tpu.dot_dimension_numbers<[1], [1], [0], [0], [0, 0, 1, 0], [], []>} : vector<8x8xf32>, vector<8x8xf32>, vector<8x8xf32> -> vector<8x8xf32>
    %cst_62 = arith.constant dense<0xFF800000> : vector<8xf32>
    %89 = vector.multi_reduction <maximumf>, %88, %cst_62 [1] : vector<8x8xf32> to vector<8xf32>
    %90 = vector.shape_cast %89 : vector<8xf32> to vector<8x1xf32>
    %91 = vector.broadcast %90 : vector<8x1xf32> to vector<8x8xf32>
    %92 = arith.subf %88, %91 : vector<8x8xf32>
    %93 = math.exp %92 : vector<8x8xf32>
    %cst_63 = arith.constant dense<0.000000e+00> : vector<8xf32>
    %94 = vector.multi_reduction <add>, %93, %cst_63 [1] : vector<8x8xf32> to vector<8xf32>
    %95 = vector.shape_cast %94 : vector<8xf32> to vector<8x1xf32>
    %96 = vector.broadcast %95 : vector<8x1xf32> to vector<8x8xf32>
    %97 = arith.divf %93, %96 : vector<8x8xf32>
    %cst_64 = arith.constant dense<0.000000e+00> : vector<8x8xf32>
    %98 = tpu.matmul %97, %85, %cst_64 {dimension_numbers = #tpu.dot_dimension_numbers<[1], [0], [0], [1], [0, 0, 1, 1], [], []>} : vector<8x8xf32>, vector<8x8xf32>, vector<8x8xf32> -> vector<8x8xf32>
    %c1_65 = arith.constant 1 : index
    %c0_66 = arith.constant 0 : index
    %c0_67 = arith.constant 0 : index
    %99 = vector.load %arg11[%c1_65, %c0_66, %c0_67] : memref<4x8x32xf32, #tpu.memory_space<vmem>>, vector<1x8x32xf32>
    %100 = vector.shape_cast %99 : vector<1x8x32xf32> to vector<8x32xf32>
    %cst_68 = arith.constant dense<0.000000e+00> : vector<8x32xf32>
    %101 = tpu.matmul %98, %100, %cst_68 {dimension_numbers = #tpu.dot_dimension_numbers<[1], [0], [0], [1], [0, 0, 1, 1], [], []>} : vector<8x8xf32>, vector<8x32xf32>, vector<8x32xf32> -> vector<8x32xf32>
    %102 = arith.addf %64, %101 : vector<8x32xf32>
    %c2 = arith.constant 2 : index
    %c0_69 = arith.constant 0 : index
    %c0_70 = arith.constant 0 : index
    %103 = vector.load %arg5[%c2, %c0_69, %c0_70] : memref<4x32x8xf32, #tpu.memory_space<vmem>>, vector<1x32x8xf32>
    %104 = vector.shape_cast %103 : vector<1x32x8xf32> to vector<32x8xf32>
    %cst_71 = arith.constant dense<0.000000e+00> : vector<8x8xf32>
    %105 = tpu.matmul %27, %104, %cst_71 {dimension_numbers = #tpu.dot_dimension_numbers<[1], [0], [0], [1], [0, 0, 1, 1], [], []>} : vector<8x32xf32>, vector<32x8xf32>, vector<8x8xf32> -> vector<8x8xf32>
    %c2_72 = arith.constant 2 : index
    %c0_73 = arith.constant 0 : index
    %c0_74 = arith.constant 0 : index
    %106 = vector.load %arg6[%c2_72, %c0_73, %c0_74] : memref<4x1x8xf32, #tpu.memory_space<vmem>>, vector<1x1x8xf32>
    %107 = vector.shape_cast %106 : vector<1x1x8xf32> to vector<1x8xf32>
    %108 = vector.broadcast %107 : vector<1x8xf32> to vector<8x8xf32>
    %109 = arith.addf %105, %108 : vector<8x8xf32>
    %c2_75 = arith.constant 2 : index
    %c0_76 = arith.constant 0 : index
    %c0_77 = arith.constant 0 : index
    %110 = vector.load %arg7[%c2_75, %c0_76, %c0_77] : memref<4x32x8xf32, #tpu.memory_space<vmem>>, vector<1x32x8xf32>
    %111 = vector.shape_cast %110 : vector<1x32x8xf32> to vector<32x8xf32>
    %cst_78 = arith.constant dense<0.000000e+00> : vector<8x8xf32>
    %112 = tpu.matmul %27, %111, %cst_78 {dimension_numbers = #tpu.dot_dimension_numbers<[1], [0], [0], [1], [0, 0, 1, 1], [], []>} : vector<8x32xf32>, vector<32x8xf32>, vector<8x8xf32> -> vector<8x8xf32>
    %c2_79 = arith.constant 2 : index
    %c0_80 = arith.constant 0 : index
    %c0_81 = arith.constant 0 : index
    %113 = vector.load %arg8[%c2_79, %c0_80, %c0_81] : memref<4x1x8xf32, #tpu.memory_space<vmem>>, vector<1x1x8xf32>
    %114 = vector.shape_cast %113 : vector<1x1x8xf32> to vector<1x8xf32>
    %115 = vector.broadcast %114 : vector<1x8xf32> to vector<8x8xf32>
    %116 = arith.addf %112, %115 : vector<8x8xf32>
    %c2_82 = arith.constant 2 : index
    %c0_83 = arith.constant 0 : index
    %c0_84 = arith.constant 0 : index
    %117 = vector.load %arg9[%c2_82, %c0_83, %c0_84] : memref<4x32x8xf32, #tpu.memory_space<vmem>>, vector<1x32x8xf32>
    %118 = vector.shape_cast %117 : vector<1x32x8xf32> to vector<32x8xf32>
    %cst_85 = arith.constant dense<0.000000e+00> : vector<8x8xf32>
    %119 = tpu.matmul %27, %118, %cst_85 {dimension_numbers = #tpu.dot_dimension_numbers<[1], [0], [0], [1], [0, 0, 1, 1], [], []>} : vector<8x32xf32>, vector<32x8xf32>, vector<8x8xf32> -> vector<8x8xf32>
    %c2_86 = arith.constant 2 : index
    %c0_87 = arith.constant 0 : index
    %c0_88 = arith.constant 0 : index
    %120 = vector.load %arg10[%c2_86, %c0_87, %c0_88] : memref<4x1x8xf32, #tpu.memory_space<vmem>>, vector<1x1x8xf32>
    %121 = vector.shape_cast %120 : vector<1x1x8xf32> to vector<1x8xf32>
    %122 = vector.broadcast %121 : vector<1x8xf32> to vector<8x8xf32>
    %123 = arith.addf %119, %122 : vector<8x8xf32>
    %cst_89 = arith.constant 0.353553385 : f32
    %124 = vector.broadcast %cst_89 : f32 to vector<8x8xf32>
    %125 = arith.mulf %109, %124 : vector<8x8xf32>
    %cst_90 = arith.constant dense<0.000000e+00> : vector<8x8xf32>
    %126 = tpu.matmul %125, %116, %cst_90 {dimension_numbers = #tpu.dot_dimension_numbers<[1], [1], [0], [0], [0, 0, 1, 0], [], []>} : vector<8x8xf32>, vector<8x8xf32>, vector<8x8xf32> -> vector<8x8xf32>
    %cst_91 = arith.constant dense<0xFF800000> : vector<8xf32>
    %127 = vector.multi_reduction <maximumf>, %126, %cst_91 [1] : vector<8x8xf32> to vector<8xf32>
    %128 = vector.shape_cast %127 : vector<8xf32> to vector<8x1xf32>
    %129 = vector.broadcast %128 : vector<8x1xf32> to vector<8x8xf32>
    %130 = arith.subf %126, %129 : vector<8x8xf32>
    %131 = math.exp %130 : vector<8x8xf32>
    %cst_92 = arith.constant dense<0.000000e+00> : vector<8xf32>
    %132 = vector.multi_reduction <add>, %131, %cst_92 [1] : vector<8x8xf32> to vector<8xf32>
    %133 = vector.shape_cast %132 : vector<8xf32> to vector<8x1xf32>
    %134 = vector.broadcast %133 : vector<8x1xf32> to vector<8x8xf32>
    %135 = arith.divf %131, %134 : vector<8x8xf32>
    %cst_93 = arith.constant dense<0.000000e+00> : vector<8x8xf32>
    %136 = tpu.matmul %135, %123, %cst_93 {dimension_numbers = #tpu.dot_dimension_numbers<[1], [0], [0], [1], [0, 0, 1, 1], [], []>} : vector<8x8xf32>, vector<8x8xf32>, vector<8x8xf32> -> vector<8x8xf32>
    %c2_94 = arith.constant 2 : index
    %c0_95 = arith.constant 0 : index
    %c0_96 = arith.constant 0 : index
    %137 = vector.load %arg11[%c2_94, %c0_95, %c0_96] : memref<4x8x32xf32, #tpu.memory_space<vmem>>, vector<1x8x32xf32>
    %138 = vector.shape_cast %137 : vector<1x8x32xf32> to vector<8x32xf32>
    %cst_97 = arith.constant dense<0.000000e+00> : vector<8x32xf32>
    %139 = tpu.matmul %136, %138, %cst_97 {dimension_numbers = #tpu.dot_dimension_numbers<[1], [0], [0], [1], [0, 0, 1, 1], [], []>} : vector<8x8xf32>, vector<8x32xf32>, vector<8x32xf32> -> vector<8x32xf32>
    %140 = arith.addf %102, %139 : vector<8x32xf32>
    %c3 = arith.constant 3 : index
    %c0_98 = arith.constant 0 : index
    %c0_99 = arith.constant 0 : index
    %141 = vector.load %arg5[%c3, %c0_98, %c0_99] : memref<4x32x8xf32, #tpu.memory_space<vmem>>, vector<1x32x8xf32>
    %142 = vector.shape_cast %141 : vector<1x32x8xf32> to vector<32x8xf32>
    %cst_100 = arith.constant dense<0.000000e+00> : vector<8x8xf32>
    %143 = tpu.matmul %27, %142, %cst_100 {dimension_numbers = #tpu.dot_dimension_numbers<[1], [0], [0], [1], [0, 0, 1, 1], [], []>} : vector<8x32xf32>, vector<32x8xf32>, vector<8x8xf32> -> vector<8x8xf32>
    %c3_101 = arith.constant 3 : index
    %c0_102 = arith.constant 0 : index
    %c0_103 = arith.constant 0 : index
    %144 = vector.load %arg6[%c3_101, %c0_102, %c0_103] : memref<4x1x8xf32, #tpu.memory_space<vmem>>, vector<1x1x8xf32>
    %145 = vector.shape_cast %144 : vector<1x1x8xf32> to vector<1x8xf32>
    %146 = vector.broadcast %145 : vector<1x8xf32> to vector<8x8xf32>
    %147 = arith.addf %143, %146 : vector<8x8xf32>
    %c3_104 = arith.constant 3 : index
    %c0_105 = arith.constant 0 : index
    %c0_106 = arith.constant 0 : index
    %148 = vector.load %arg7[%c3_104, %c0_105, %c0_106] : memref<4x32x8xf32, #tpu.memory_space<vmem>>, vector<1x32x8xf32>
    %149 = vector.shape_cast %148 : vector<1x32x8xf32> to vector<32x8xf32>
    %cst_107 = arith.constant dense<0.000000e+00> : vector<8x8xf32>
    %150 = tpu.matmul %27, %149, %cst_107 {dimension_numbers = #tpu.dot_dimension_numbers<[1], [0], [0], [1], [0, 0, 1, 1], [], []>} : vector<8x32xf32>, vector<32x8xf32>, vector<8x8xf32> -> vector<8x8xf32>
    %c3_108 = arith.constant 3 : index
    %c0_109 = arith.constant 0 : index
    %c0_110 = arith.constant 0 : index
    %151 = vector.load %arg8[%c3_108, %c0_109, %c0_110] : memref<4x1x8xf32, #tpu.memory_space<vmem>>, vector<1x1x8xf32>
    %152 = vector.shape_cast %151 : vector<1x1x8xf32> to vector<1x8xf32>
    %153 = vector.broadcast %152 : vector<1x8xf32> to vector<8x8xf32>
    %154 = arith.addf %150, %153 : vector<8x8xf32>
    %c3_111 = arith.constant 3 : index
    %c0_112 = arith.constant 0 : index
    %c0_113 = arith.constant 0 : index
    %155 = vector.load %arg9[%c3_111, %c0_112, %c0_113] : memref<4x32x8xf32, #tpu.memory_space<vmem>>, vector<1x32x8xf32>
    %156 = vector.shape_cast %155 : vector<1x32x8xf32> to vector<32x8xf32>
    %cst_114 = arith.constant dense<0.000000e+00> : vector<8x8xf32>
    %157 = tpu.matmul %27, %156, %cst_114 {dimension_numbers = #tpu.dot_dimension_numbers<[1], [0], [0], [1], [0, 0, 1, 1], [], []>} : vector<8x32xf32>, vector<32x8xf32>, vector<8x8xf32> -> vector<8x8xf32>
    %c3_115 = arith.constant 3 : index
    %c0_116 = arith.constant 0 : index
    %c0_117 = arith.constant 0 : index
    %158 = vector.load %arg10[%c3_115, %c0_116, %c0_117] : memref<4x1x8xf32, #tpu.memory_space<vmem>>, vector<1x1x8xf32>
    %159 = vector.shape_cast %158 : vector<1x1x8xf32> to vector<1x8xf32>
    %160 = vector.broadcast %159 : vector<1x8xf32> to vector<8x8xf32>
    %161 = arith.addf %157, %160 : vector<8x8xf32>
    %cst_118 = arith.constant 0.353553385 : f32
    %162 = vector.broadcast %cst_118 : f32 to vector<8x8xf32>
    %163 = arith.mulf %147, %162 : vector<8x8xf32>
    %cst_119 = arith.constant dense<0.000000e+00> : vector<8x8xf32>
    %164 = tpu.matmul %163, %154, %cst_119 {dimension_numbers = #tpu.dot_dimension_numbers<[1], [1], [0], [0], [0, 0, 1, 0], [], []>} : vector<8x8xf32>, vector<8x8xf32>, vector<8x8xf32> -> vector<8x8xf32>
    %cst_120 = arith.constant dense<0xFF800000> : vector<8xf32>
    %165 = vector.multi_reduction <maximumf>, %164, %cst_120 [1] : vector<8x8xf32> to vector<8xf32>
    %166 = vector.shape_cast %165 : vector<8xf32> to vector<8x1xf32>
    %167 = vector.broadcast %166 : vector<8x1xf32> to vector<8x8xf32>
    %168 = arith.subf %164, %167 : vector<8x8xf32>
    %169 = math.exp %168 : vector<8x8xf32>
    %cst_121 = arith.constant dense<0.000000e+00> : vector<8xf32>
    %170 = vector.multi_reduction <add>, %169, %cst_121 [1] : vector<8x8xf32> to vector<8xf32>
    %171 = vector.shape_cast %170 : vector<8xf32> to vector<8x1xf32>
    %172 = vector.broadcast %171 : vector<8x1xf32> to vector<8x8xf32>
    %173 = arith.divf %169, %172 : vector<8x8xf32>
    %cst_122 = arith.constant dense<0.000000e+00> : vector<8x8xf32>
    %174 = tpu.matmul %173, %161, %cst_122 {dimension_numbers = #tpu.dot_dimension_numbers<[1], [0], [0], [1], [0, 0, 1, 1], [], []>} : vector<8x8xf32>, vector<8x8xf32>, vector<8x8xf32> -> vector<8x8xf32>
    %c3_123 = arith.constant 3 : index
    %c0_124 = arith.constant 0 : index
    %c0_125 = arith.constant 0 : index
    %175 = vector.load %arg11[%c3_123, %c0_124, %c0_125] : memref<4x8x32xf32, #tpu.memory_space<vmem>>, vector<1x8x32xf32>
    %176 = vector.shape_cast %175 : vector<1x8x32xf32> to vector<8x32xf32>
    %cst_126 = arith.constant dense<0.000000e+00> : vector<8x32xf32>
    %177 = tpu.matmul %174, %176, %cst_126 {dimension_numbers = #tpu.dot_dimension_numbers<[1], [0], [0], [1], [0, 0, 1, 1], [], []>} : vector<8x8xf32>, vector<8x32xf32>, vector<8x32xf32> -> vector<8x32xf32>
    %178 = arith.addf %140, %177 : vector<8x32xf32>
    %c0_127 = arith.constant 0 : index
    %c0_128 = arith.constant 0 : index
    %179 = vector.load %arg12[%c0_127, %c0_128] : memref<1x32xf32, #tpu.memory_space<vmem>>, vector<1x32xf32>
    %180 = vector.broadcast %179 : vector<1x32xf32> to vector<8x32xf32>
    %181 = arith.addf %178, %180 : vector<8x32xf32>
    %c0_129 = arith.constant 0 : index
    %c0_130 = arith.constant 0 : index
    %182 = vector.load %arg13[%c0_129, %c0_130] : memref<1x32xf32, #tpu.memory_space<vmem>>, vector<1x32xf32>
    %183 = vector.broadcast %182 : vector<1x32xf32> to vector<8x32xf32>
    %184 = arith.mulf %181, %183 : vector<8x32xf32>
    %185 = vector.broadcast %1 : f32 to vector<8x32xf32>
    %186 = arith.mulf %185, %184 : vector<8x32xf32>
    %187 = arith.addf %3, %186 : vector<8x32xf32>
    %c0_131 = arith.constant 0 : index
    %c0_132 = arith.constant 0 : index
    %c0_133 = arith.constant 0 : index
    %188 = vector.load %arg14[%c0_131, %c0_132, %c0_133] : memref<1x8x32xf32, #tpu.memory_space<vmem>>, vector<1x8x32xf32>
    %189 = vector.shape_cast %188 : vector<1x8x32xf32> to vector<8x32xf32>
    %190 = vector.shape_cast %187 : vector<8x32xf32> to vector<1x8x32xf32>
    tpu.vector_store %arg14[%c0_131, %c0_132, %c0_133], %190 {strides = array<i32>} : memref<1x8x32xf32, #tpu.memory_space<vmem>>, vector<1x8x32xf32>,
    return
  }
  func.func @transform_0(%arg0: i32, %arg1: memref<2xf32, #tpu.memory_space<smem>>) -> (i32, i32, i32) {
    %c0_i32 = arith.constant 0 : i32
    %c0_i32_0 = arith.constant 0 : i32
    %c0_i32_1 = arith.constant 0 : i32
    return %arg0, %c0_i32, %c0_i32_0 : i32, i32, i32
  }
  func.func @transform_1(%arg0: i32, %arg1: memref<2xf32, #tpu.memory_space<smem>>) -> (i32, i32) {
    %c0_i32 = arith.constant 0 : i32
    %c0_i32_0 = arith.constant 0 : i32
    %c0_i32_1 = arith.constant 0 : i32
    return %c0_i32, %c0_i32_0 : i32, i32
  }
  func.func @transform_2(%arg0: i32, %arg1: memref<2xf32, #tpu.memory_space<smem>>) -> (i32, i32) {
    %c0_i32 = arith.constant 0 : i32
    %c0_i32_0 = arith.constant 0 : i32
    %c0_i32_1 = arith.constant 0 : i32
    return %c0_i32, %c0_i32_0 : i32, i32
  }
  func.func @transform_3(%arg0: i32, %arg1: memref<2xf32, #tpu.memory_space<smem>>) -> (i32, i32, i32) {
    %c0_i32 = arith.constant 0 : i32
    %c0_i32_0 = arith.constant 0 : i32
    %c0_i32_1 = arith.constant 0 : i32
    %c0_i32_2 = arith.constant 0 : i32
    return %c0_i32, %c0_i32_0, %c0_i32_1 : i32, i32, i32
  }
  func.func @transform_4(%arg0: i32, %arg1: memref<2xf32, #tpu.memory_space<smem>>) -> (i32, i32, i32) {
    %c0_i32 = arith.constant 0 : i32
    %c0_i32_0 = arith.constant 0 : i32
    %c0_i32_1 = arith.constant 0 : i32
    %c0_i32_2 = arith.constant 0 : i32
    return %c0_i32, %c0_i32_0, %c0_i32_1 : i32, i32, i32
  }
  func.func @transform_5(%arg0: i32, %arg1: memref<2xf32, #tpu.memory_space<smem>>) -> (i32, i32, i32) {
    %c0_i32 = arith.constant 0 : i32
    %c0_i32_0 = arith.constant 0 : i32
    %c0_i32_1 = arith.constant 0 : i32
    %c0_i32_2 = arith.constant 0 : i32
    return %c0_i32, %c0_i32_0, %c0_i32_1 : i32, i32, i32
  }
  func.func @transform_6(%arg0: i32, %arg1: memref<2xf32, #tpu.memory_space<smem>>) -> (i32, i32, i32) {
    %c0_i32 = arith.constant 0 : i32
    %c0_i32_0 = arith.constant 0 : i32
    %c0_i32_1 = arith.constant 0 : i32
    %c0_i32_2 = arith.constant 0 : i32
    return %c0_i32, %c0_i32_0, %c0_i32_1 : i32, i32, i32
  }
  func.func @transform_7(%arg0: i32, %arg1: memref<2xf32, #tpu.memory_space<smem>>) -> (i32, i32, i32) {
    %c0_i32 = arith.constant 0 : i32
    %c0_i32_0 = arith.constant 0 : i32
    %c0_i32_1 = arith.constant 0 : i32
    %c0_i32_2 = arith.constant 0 : i32
    return %c0_i32, %c0_i32_0, %c0_i32_1 : i32, i32, i32
  }
  func.func @transform_8(%arg0: i32, %arg1: memref<2xf32, #tpu.memory_space<smem>>) -> (i32, i32, i32) {
    %c0_i32 = arith.constant 0 : i32
    %c0_i32_0 = arith.constant 0 : i32
    %c0_i32_1 = arith.constant 0 : i32
    %c0_i32_2 = arith.constant 0 : i32
    return %c0_i32, %c0_i32_0, %c0_i32_1 : i32, i32, i32
  }
  func.func @transform_9(%arg0: i32, %arg1: memref<2xf32, #tpu.memory_space<smem>>) -> (i32, i32, i32) {
    %c0_i32 = arith.constant 0 : i32
    %c0_i32_0 = arith.constant 0 : i32
    %c0_i32_1 = arith.constant 0 : i32
    %c0_i32_2 = arith.constant 0 : i32
    return %c0_i32, %c0_i32_0, %c0_i32_1 : i32, i32, i32
  }
  func.func @transform_10(%arg0: i32, %arg1: memref<2xf32, #tpu.memory_space<smem>>) -> (i32, i32) {
    %c0_i32 = arith.constant 0 : i32
    %c0_i32_0 = arith.constant 0 : i32
    %c0_i32_1 = arith.constant 0 : i32
    return %c0_i32, %c0_i32_0 : i32, i32
  }
  func.func @transform_11(%arg0: i32, %arg1: memref<2xf32, #tpu.memory_space<smem>>) -> (i32, i32) {
    %c0_i32 = arith.constant 0 : i32
    %c0_i32_0 = arith.constant 0 : i32
    %c0_i32_1 = arith.constant 0 : i32
    return %c0_i32, %c0_i32_0 : i32, i32
  }
  func.func @transform_12(%arg0: i32, %arg1: memref<2xf32, #tpu.memory_space<smem>>) -> (i32, i32, i32) {
    %c0_i32 = arith.constant 0 : i32
    %c0_i32_0 = arith.constant 0 : i32
    %c0_i32_1 = arith.constant 0 : i32
    return %arg0, %c0_i32, %c0_i32_0 : i32, i32, i32
  }
}

</mosaic_0001>

<llo_original>
// kernel: tpu_custom_call.1
$region0: #{tpu_custom_call.1}
  #allocation0 [shape = 'u32[]', space=smem, size = 0x4, offset = 0x4, fixed_abs, tag = 'smem constant byte address 0x4 - core index']
  #allocation1 [shape = 'u32[144,128]{1,0:T(1,128)}', space=vmem, size = 0x12000, scoped, tag = 'internal scratch']
  #allocation2 [shape = 's32[1]{0}', space=sflag, size = 0x4, scoped, tag = 'scoped memory for tpu_custom_call.1']
  #allocation3 [shape = 'u8[512]{0}', space=smem, size = 0x200, scoped, tag = 'prefetched SMEM operand 0']
  %s0 = inlined_call_operand.vmem [shape: f32[2], index: 0, kind: input, shape index: {}]
  %s1 = inlined_call_operand.vmem [shape: f32[2,8,32], index: 1, kind: input, shape index: {}]
  %s2 = inlined_call_operand.vmem [shape: f32[1,32], index: 2, kind: input, shape index: {}]
  %s3 = inlined_call_operand.vmem [shape: f32[1,32], index: 3, kind: input, shape index: {}]
  %s4 = inlined_call_operand.vmem [shape: f32[4,32,8], index: 4, kind: input, shape index: {}]
  %s5 = inlined_call_operand.vmem [shape: f32[4,1,8], index: 5, kind: input, shape index: {}]
  %s6 = inlined_call_operand.vmem [shape: f32[4,32,8], index: 6, kind: input, shape index: {}]
  %s7 = inlined_call_operand.vmem [shape: f32[4,1,8], index: 7, kind: input, shape index: {}]
  %s8 = inlined_call_operand.vmem [shape: f32[4,32,8], index: 8, kind: input, shape index: {}]
  %s9 = inlined_call_operand.vmem [shape: f32[4,1,8], index: 9, kind: input, shape index: {}]
  %s10 = inlined_call_operand.vmem [shape: f32[4,8,32], index: 10, kind: input, shape index: {}]
  %s11 = inlined_call_operand.vmem [shape: f32[1,32], index: 11, kind: input, shape index: {}]
  %s12 = inlined_call_operand.vmem [shape: f32[1,32], index: 12, kind: input, shape index: {}]
  %s13 = inlined_call_operand.hbm [shape: f32[2,8,32], index: 13, kind: output, shape index: {}]
  %s14 = sld [smem:[#allocation0]]
  $region81: #{tpu_custom_call.1} parent=0
    _
  %s16 = ssub.s32 1, %s14
  %s17 = scalar_select 0, %s16, %s14
  %s18 = sshll.u32 %s0, 4
  %s19 = int_to_ptr.vmem [resolvable:$true] %s18
  %21 = dma.vmem_to_smem %s19, 16, [#allocation3], [#allocation2]
  %22 = dma.done [#allocation2], 16
  %23 = sfence
  $region1: #{tpu_custom_call.1} parent=0
    #allocation4 [shape = 'u8[8192]{0}', space=vmem, size = 0x2000, scoped, tag = 'output window, operand 0']
    #allocation5 [shape = 's32[2]{0}', space=sflag, size = 0x8, scoped, tag = 'scoped memory for tpu_custom_call.1']
    %24 = vsyncpa [#allocation5], 0
    %s25 = scalar_lea.sflag [#allocation5], 1
    %26 = vsyncpa %s25, 0
    loop: start=0, step=1, limit=4
    $region2: #{tpu_custom_call.1} parent=1 // loop_pre_header
      _
    $region3: #{tpu_custom_call.1} parent=1 // loop_header
      %s28 = sphi 0, %s32
      %p29 = scmp.ge.s32.totalorder %s28, 4
      %s38 = sphi 0, %s40
      %s41 = sphi 0, %s38
      %s42 = sphi 0, %s41
      %s58 = sphi 0, %s42
      %s62 = sphi 0, %s62
      %s64 = sphi 0, %s62
      %s65 = sphi 0, %s64
      %s79 = sphi 0, %s65
      %s83 = sphi 0, %s83
      %s85 = sphi 0, %s83
      %s86 = sphi 0, %s85
      %s100 = sphi 0, %s86
      %s104 = sphi 0, %s104
      %s106 = sphi 0, %s104
      %s107 = sphi 0, %s106
      %s121 = sphi 0, %s107
      %s125 = sphi 0, %s125
      %s127 = sphi 0, %s125
      %s128 = sphi 0, %s127
      %s142 = sphi 0, %s128
      %s146 = sphi 0, %s146
      %s148 = sphi 0, %s146
      %s149 = sphi 0, %s148
      %s163 = sphi 0, %s149
      %s167 = sphi 0, %s167
      %s169 = sphi 0, %s167
      %s170 = sphi 0, %s169
      %s184 = sphi 0, %s170
      %s188 = sphi 0, %s188
      %s190 = sphi 0, %s188
      %s191 = sphi 0, %s190
      %s205 = sphi 0, %s191
      %s209 = sphi 0, %s209
      %s211 = sphi 0, %s209
      %s212 = sphi 0, %s211
      %s226 = sphi 0, %s212
      %s230 = sphi 0, %s230
      %s232 = sphi 0, %s230
      %s233 = sphi 0, %s232
      %s247 = sphi 0, %s233
      %s251 = sphi 0, %s251
      %s253 = sphi 0, %s251
      %s254 = sphi 0, %s253
      %s268 = sphi 0, %s254
      %s272 = sphi 0, %s272
      %s274 = sphi 0, %s272
      %s275 = sphi 0, %s274
      %s289 = sphi 0, %s275
      %s295 = sphi 0, %s297
      %s298 = sphi 0, %s295
      %s299 = sphi 0, %s298
      %s315 = sphi 0, %s299
    $region4: #{tpu_custom_call.1} parent=1 // loop_header_branch
      %31 = sbr.rel (%p29) target = $region8
    $region5: #{tpu_custom_call.1} parent=1 // loop_body
      %s33 = ssub.s32 %s28, 1
      %s34 = ssub.s32 %s28, 2
      %s35 = sadd.s32 %s28, 1
      %s36 = ssub.s32 %s28, %s35
      %p37 = scmp.eq.s32.totalorder %s36, 0
      %s39 = sadd.s32 %s38, 1
      %s40 = scalar_select %p37, %s38, %s39
      %p43 = pneg %p37
      %p44 = scmp.eq.s32.totalorder %s28, 1
      %p45 = por %p43, %p44
      %p46 = scmp.ne.s32.totalorder %s38, %s41
      %p47 = scmp.eq.s32.totalorder %s28, 0
      %p48 = por %p46, %p47
      %p49 = scmp.ne.s32.totalorder %s38, %s41
      %p50 = scmp.eq.s32.totalorder %s33, 1
      %p51 = por %p49, %p50
      %p52 = scmp.ne.s32.totalorder %s41, %s42
      %p53 = scmp.eq.s32.totalorder %s33, 0
      %p54 = por %p52, %p53
      %p55 = scmp.ne.s32.totalorder %s41, %s42
      %p56 = scmp.eq.s32.totalorder %s34, 1
      %p57 = por %p55, %p56
      %p59 = scmp.ne.s32.totalorder %s42, %s58
      %p60 = scmp.eq.s32.totalorder %s34, 0
      %p61 = por %p59, %p60
      %s63 = sadd.s32 %s62, 1
      %p66 = scmp.eq.s32.totalorder %s28, 1
      %p67 = scmp.ne.s32.totalorder %s62, %s64
      %p68 = scmp.eq.s32.totalorder %s28, 0
      %p69 = por %p67, %p68
      %p70 = scmp.ne.s32.totalorder %s62, %s64
      %p71 = scmp.eq.s32.totalorder %s33, 1
      %p72 = por %p70, %p71
      %p73 = scmp.ne.s32.totalorder %s64, %s65
      %p74 = scmp.eq.s32.totalorder %s33, 0
      %p75 = por %p73, %p74
      %p76 = scmp.ne.s32.totalorder %s64, %s65
      %p77 = scmp.eq.s32.totalorder %s34, 1
      %p78 = por %p76, %p77
      %p80 = scmp.ne.s32.totalorder %s65, %s79
      %p81 = scmp.eq.s32.totalorder %s34, 0
      %p82 = por %p80, %p81
      %s84 = sadd.s32 %s83, 1
      %p87 = scmp.eq.s32.totalorder %s28, 1
      %p88 = scmp.ne.s32.totalorder %s83, %s85
      %p89 = scmp.eq.s32.totalorder %s28, 0
      %p90 = por %p88, %p89
      %p91 = scmp.ne.s32.totalorder %s83, %s85
      %p92 = scmp.eq.s32.totalorder %s33, 1
      %p93 = por %p91, %p92
      %p94 = scmp.ne.s32.totalorder %s85, %s86
      %p95 = scmp.eq.s32.totalorder %s33, 0
      %p96 = por %p94, %p95
      %p97 = scmp.ne.s32.totalorder %s85, %s86
      %p98 = scmp.eq.s32.totalorder %s34, 1
      %p99 = por %p97, %p98
      %p101 = scmp.ne.s32.totalorder %s86, %s100
      %p102 = scmp.eq.s32.totalorder %s34, 0
      %p103 = por %p101, %p102
      %s105 = sadd.s32 %s104, 1
      %p108 = scmp.eq.s32.totalorder %s28, 1
      %p109 = scmp.ne.s32.totalorder %s104, %s106
      %p110 = scmp.eq.s32.totalorder %s28, 0
      %p111 = por %p109, %p110
      %p112 = scmp.ne.s32.totalorder %s104, %s106
      %p113 = scmp.eq.s32.totalorder %s33, 1
      %p114 = por %p112, %p113
      %p115 = scmp.ne.s32.totalorder %s106, %s107
      %p116 = scmp.eq.s32.totalorder %s33, 0
      %p117 = por %p115, %p116
      %p118 = scmp.ne.s32.totalorder %s106, %s107
      %p119 = scmp.eq.s32.totalorder %s34, 1
      %p120 = por %p118, %p119
      %p122 = scmp.ne.s32.totalorder %s107, %s121
      %p123 = scmp.eq.s32.totalorder %s34, 0
      %p124 = por %p122, %p123
      %s126 = sadd.s32 %s125, 1
      %p129 = scmp.eq.s32.totalorder %s28, 1
      %p130 = scmp.ne.s32.totalorder %s125, %s127
      %p131 = scmp.eq.s32.totalorder %s28, 0
      %p132 = por %p130, %p131
      %p133 = scmp.ne.s32.totalorder %s125, %s127
      %p134 = scmp.eq.s32.totalorder %s33, 1
      %p135 = por %p133, %p134
      %p136 = scmp.ne.s32.totalorder %s127, %s128
      %p137 = scmp.eq.s32.totalorder %s33, 0
      %p138 = por %p136, %p137
      %p139 = scmp.ne.s32.totalorder %s127, %s128
      %p140 = scmp.eq.s32.totalorder %s34, 1
      %p141 = por %p139, %p140
      %p143 = scmp.ne.s32.totalorder %s128, %s142
      %p144 = scmp.eq.s32.totalorder %s34, 0
      %p145 = por %p143, %p144
      %s147 = sadd.s32 %s146, 1
      %p150 = scmp.eq.s32.totalorder %s28, 1
      %p151 = scmp.ne.s32.totalorder %s146, %s148
      %p152 = scmp.eq.s32.totalorder %s28, 0
      %p153 = por %p151, %p152
      %p154 = scmp.ne.s32.totalorder %s146, %s148
      %p155 = scmp.eq.s32.totalorder %s33, 1
      %p156 = por %p154, %p155
      %p157 = scmp.ne.s32.totalorder %s148, %s149
      %p158 = scmp.eq.s32.totalorder %s33, 0
      %p159 = por %p157, %p158
      %p160 = scmp.ne.s32.totalorder %s148, %s149
      %p161 = scmp.eq.s32.totalorder %s34, 1
      %p162 = por %p160, %p161
      %p164 = scmp.ne.s32.totalorder %s149, %s163
      %p165 = scmp.eq.s32.totalorder %s34, 0
      %p166 = por %p164, %p165
      %s168 = sadd.s32 %s167, 1
      %p171 = scmp.eq.s32.totalorder %s28, 1
      %p172 = scmp.ne.s32.totalorder %s167, %s169
      %p173 = scmp.eq.s32.totalorder %s28, 0
      %p174 = por %p172, %p173
      %p175 = scmp.ne.s32.totalorder %s167, %s169
      %p176 = scmp.eq.s32.totalorder %s33, 1
      %p177 = por %p175, %p176
      %p178 = scmp.ne.s32.totalorder %s169, %s170
      %p179 = scmp.eq.s32.totalorder %s33, 0
      %p180 = por %p178, %p179
      %p181 = scmp.ne.s32.totalorder %s169, %s170
      %p182 = scmp.eq.s32.totalorder %s34, 1
      %p183 = por %p181, %p182
      %p185 = scmp.ne.s32.totalorder %s170, %s184
      %p186 = scmp.eq.s32.totalorder %s34, 0
      %p187 = por %p185, %p186
      %s189 = sadd.s32 %s188, 1
      %p192 = scmp.eq.s32.totalorder %s28, 1
      %p193 = scmp.ne.s32.totalorder %s188, %s190
      %p194 = scmp.eq.s32.totalorder %s28, 0
      %p195 = por %p193, %p194
      %p196 = scmp.ne.s32.totalorder %s188, %s190
      %p197 = scmp.eq.s32.totalorder %s33, 1
      %p198 = por %p196, %p197
      %p199 = scmp.ne.s32.totalorder %s190, %s191
      %p200 = scmp.eq.s32.totalorder %s33, 0
      %p201 = por %p199, %p200
      %p202 = scmp.ne.s32.totalorder %s190, %s191
      %p203 = scmp.eq.s32.totalorder %s34, 1
      %p204 = por %p202, %p203
      %p206 = scmp.ne.s32.totalorder %s191, %s205
      %p207 = scmp.eq.s32.totalorder %s34, 0
      %p208 = por %p206, %p207
      %s210 = sadd.s32 %s209, 1
      %p213 = scmp.eq.s32.totalorder %s28, 1
      %p214 = scmp.ne.s32.totalorder %s209, %s211
      %p215 = scmp.eq.s32.totalorder %s28, 0
      %p216 = por %p214, %p215
      %p217 = scmp.ne.s32.totalorder %s209, %s211
      %p218 = scmp.eq.s32.totalorder %s33, 1
      %p219 = por %p217, %p218
      %p220 = scmp.ne.s32.totalorder %s211, %s212
      %p221 = scmp.eq.s32.totalorder %s33, 0
      %p222 = por %p220, %p221
      %p223 = scmp.ne.s32.totalorder %s211, %s212
      %p224 = scmp.eq.s32.totalorder %s34, 1
      %p225 = por %p223, %p224
      %p227 = scmp.ne.s32.totalorder %s212, %s226
      %p228 = scmp.eq.s32.totalorder %s34, 0
      %p229 = por %p227, %p228
      %s231 = sadd.s32 %s230, 1
      %p234 = scmp.eq.s32.totalorder %s28, 1
      %p235 = scmp.ne.s32.totalorder %s230, %s232
      %p236 = scmp.eq.s32.totalorder %s28, 0
      %p237 = por %p235, %p236
      %p238 = scmp.ne.s32.totalorder %s230, %s232
      %p239 = scmp.eq.s32.totalorder %s33, 1
      %p240 = por %p238, %p239
      %p241 = scmp.ne.s32.totalorder %s232, %s233
      %p242 = scmp.eq.s32.totalorder %s33, 0
      %p243 = por %p241, %p242
      %p244 = scmp.ne.s32.totalorder %s232, %s233
      %p245 = scmp.eq.s32.totalorder %s34, 1
      %p246 = por %p244, %p245
      %p248 = scmp.ne.s32.totalorder %s233, %s247
      %p249 = scmp.eq.s32.totalorder %s34, 0
      %p250 = por %p248, %p249
      %s252 = sadd.s32 %s251, 1
      %p255 = scmp.eq.s32.totalorder %s28, 1
      %p256 = scmp.ne.s32.totalorder %s251, %s253
      %p257 = scmp.eq.s32.totalorder %s28, 0
      %p258 = por %p256, %p257
      %p259 = scmp.ne.s32.totalorder %s251, %s253
      %p260 = scmp.eq.s32.totalorder %s33, 1
      %p261 = por %p259, %p260
      %p262 = scmp.ne.s32.totalorder %s253, %s254
      %p263 = scmp.eq.s32.totalorder %s33, 0
      %p264 = por %p262, %p263
      %p265 = scmp.ne.s32.totalorder %s253, %s254
      %p266 = scmp.eq.s32.totalorder %s34, 1
      %p267 = por %p265, %p266
      %p269 = scmp.ne.s32.totalorder %s254, %s268
      %p270 = scmp.eq.s32.totalorder %s34, 0
      %p271 = por %p269, %p270
      %s273 = sadd.s32 %s272, 1
      %p276 = scmp.eq.s32.totalorder %s28, 1
      %p277 = scmp.ne.s32.totalorder %s272, %s274
      %p278 = scmp.eq.s32.totalorder %s28, 0
      %p279 = por %p277, %p278
      %p280 = scmp.ne.s32.totalorder %s272, %s274
      %p281 = scmp.eq.s32.totalorder %s33, 1
      %p282 = por %p280, %p281
      %p283 = scmp.ne.s32.totalorder %s274, %s275
      %p284 = scmp.eq.s32.totalorder %s33, 0
      %p285 = por %p283, %p284
      %p286 = scmp.ne.s32.totalorder %s274, %s275
      %p287 = scmp.eq.s32.totalorder %s34, 1
      %p288 = por %p286, %p287
      %p290 = scmp.ne.s32.totalorder %s275, %s289
      %p291 = scmp.eq.s32.totalorder %s34, 0
      %p292 = por %p290, %p291
      %s293 = ssub.s32 %s28, %s35
      %p294 = scmp.eq.s32.totalorder %s293, 0
      %s296 = sadd.s32 %s295, 1
      %s297 = scalar_select %p294, %s295, %s296
      %p300 = pneg %p294
      %p301 = scmp.eq.s32.totalorder %s28, 1
      %p302 = por %p300, %p301
      %p303 = scmp.ne.s32.totalorder %s295, %s298
      %p304 = scmp.eq.s32.totalorder %s28, 0
      %p305 = por %p303, %p304
      %p306 = scmp.ne.s32.totalorder %s295, %s298
      %p307 = scmp.eq.s32.totalorder %s33, 1
      %p308 = por %p306, %p307
      %p309 = scmp.ne.s32.totalorder %s298, %s299
      %p310 = scmp.eq.s32.totalorder %s33, 0
      %p311 = por %p309, %p310
      %p312 = scmp.ne.s32.totalorder %s298, %s299
      %p313 = scmp.eq.s32.totalorder %s34, 1
      %p314 = por %p312, %p313
      %p316 = scmp.ne.s32.totalorder %s299, %s315
      %p317 = scmp.eq.s32.totalorder %s34, 0
      %p318 = por %p316, %p317
      %p319 = scmp.le.s32.totalorder 1, %s28
      %p320 = scmp.lt.s32.totalorder %s28, 3
      %p321 = pnand %p319, %p320
      %p322 = pneg %p321
      // Predicated region
      $region9: #{tpu_custom_call.1} parent=5 // pred_check
        _
      $region10: #{tpu_custom_call.1} parent=5 // pred_check_branch
        %324 = sbr.rel (%p321) target = $region12
      $region11: #{tpu_custom_call.1} parent=5 // pred_region
        %s325 = ssub.s32 %s28, 1
        // Predicated region
        $region13: #{tpu_custom_call.1} parent=11 // pred_check
          %p326 = pneg %p75
        $region14: #{tpu_custom_call.1} parent=11 // pred_check_branch
          %328 = sbr.rel (%p326) target = $region16
        $region15: #{tpu_custom_call.1} parent=11 // pred_region
          _
        $region16: #{tpu_custom_call.1} parent=11 // pred_fallthru
          _
        // Predicated region
        $region17: #{tpu_custom_call.1} parent=11 // pred_check
          %p329 = pneg %p96
        $region18: #{tpu_custom_call.1} parent=11 // pred_check_branch
          %331 = sbr.rel (%p329) target = $region20
        $region19: #{tpu_custom_call.1} parent=11 // pred_region
          _
        $region20: #{tpu_custom_call.1} parent=11 // pred_fallthru
          _
        // Predicated region
        $region21: #{tpu_custom_call.1} parent=11 // pred_check
          %p332 = pneg %p117
        $region22: #{tpu_custom_call.1} parent=11 // pred_check_branch
          %334 = sbr.rel (%p332) target = $region24
        $region23: #{tpu_custom_call.1} parent=11 // pred_region
          _
        $region24: #{tpu_custom_call.1} parent=11 // pred_fallthru
          _
        // Predicated region
        $region25: #{tpu_custom_call.1} parent=11 // pred_check
          %p335 = pneg %p138
        $region26: #{tpu_custom_call.1} parent=11 // pred_check_branch
          %337 = sbr.rel (%p335) target = $region28
        $region27: #{tpu_custom_call.1} parent=11 // pred_region
          _
        $region28: #{tpu_custom_call.1} parent=11 // pred_fallthru
          _
        // Predicated region
        $region29: #{tpu_custom_call.1} parent=11 // pred_check
          %p338 = pneg %p159
        $region30: #{tpu_custom_call.1} parent=11 // pred_check_branch
          %340 = sbr.rel (%p338) target = $region32
        $region31: #{tpu_custom_call.1} parent=11 // pred_region
          _
        $region32: #{tpu_custom_call.1} parent=11 // pred_fallthru
          _
        // Predicated region
        $region33: #{tpu_custom_call.1} parent=11 // pred_check
          %p341 = pneg %p180
        $region34: #{tpu_custom_call.1} parent=11 // pred_check_branch
          %343 = sbr.rel (%p341) target = $region36
        $region35: #{tpu_custom_call.1} parent=11 // pred_region
          _
        $region36: #{tpu_custom_call.1} parent=11 // pred_fallthru
          _
        // Predicated region
        $region37: #{tpu_custom_call.1} parent=11 // pred_check
          %p344 = pneg %p201
        $region38: #{tpu_custom_call.1} parent=11 // pred_check_branch
          %346 = sbr.rel (%p344) target = $region40
        $region39: #{tpu_custom_call.1} parent=11 // pred_region
          _
        $region40: #{tpu_custom_call.1} parent=11 // pred_fallthru
          _
        // Predicated region
        $region41: #{tpu_custom_call.1} parent=11 // pred_check
          %p347 = pneg %p222
        $region42: #{tpu_custom_call.1} parent=11 // pred_check_branch
          %349 = sbr.rel (%p347) target = $region44
        $region43: #{tpu_custom_call.1} parent=11 // pred_region
          _
        $region44: #{tpu_custom_call.1} parent=11 // pred_fallthru
          _
        // Predicated region
        $region45: #{tpu_custom_call.1} parent=11 // pred_check
          %p350 = pneg %p243
        $region46: #{tpu_custom_call.1} parent=11 // pred_check_branch
          %352 = sbr.rel (%p350) target = $region48
        $region47: #{tpu_custom_call.1} parent=11 // pred_region
          _
        $region48: #{tpu_custom_call.1} parent=11 // pred_fallthru
          _
        // Predicated region
        $region49: #{tpu_custom_call.1} parent=11 // pred_check
          %p353 = pneg %p264
        $region50: #{tpu_custom_call.1} parent=11 // pred_check_branch
          %355 = sbr.rel (%p353) target = $region52
        $region51: #{tpu_custom_call.1} parent=11 // pred_region
          _
        $region52: #{tpu_custom_call.1} parent=11 // pred_fallthru
          _
        // Predicated region
        $region53: #{tpu_custom_call.1} parent=11 // pred_check
          %p356 = pneg %p285
        $region54: #{tpu_custom_call.1} parent=11 // pred_check_branch
          %358 = sbr.rel (%p356) target = $region56
        $region55: #{tpu_custom_call.1} parent=11 // pred_region
          _
        $region56: #{tpu_custom_call.1} parent=11 // pred_fallthru
          _
      $region12: #{tpu_custom_call.1} parent=5 // pred_fallthru
        _
      %p359 = scmp.lt.s32.totalorder %s28, 2
      // Predicated region
      $region57: #{tpu_custom_call.1} parent=5 // pred_check
        %p360 = pneg %p359
      $region58: #{tpu_custom_call.1} parent=5 // pred_check_branch
        %362 = sbr.rel (%p360) target = $region60
      $region59: #{tpu_custom_call.1} parent=5 // pred_region
        // Predicated region
        $region61: #{tpu_custom_call.1} parent=59 // pred_check
          %p363 = pneg %p48
        $region62: #{tpu_custom_call.1} parent=59 // pred_check_branch
          %365 = sbr.rel (%p363) target = $region64
        $region63: #{tpu_custom_call.1} parent=59 // pred_region
          %p366 = scmp.lt.s32.totalorder %s28, 1
          %s367 = scalar_select %p366, %s28, 1
          %s368 = smul.addr %s367, 8
          %s369 = scalar_lea.vmem %s1, %s368
        $region64: #{tpu_custom_call.1} parent=59 // pred_fallthru
          _
      $region60: #{tpu_custom_call.1} parent=5 // pred_fallthru
        _
      %p370 = scmp.le.s32.totalorder 1, %s28
      %p371 = scmp.lt.s32.totalorder %s28, 3
      %p372 = pnand %p370, %p371
      %p373 = pneg %p372
      // Predicated region
      $region65: #{tpu_custom_call.1} parent=5 // pred_check
        _
      $region66: #{tpu_custom_call.1} parent=5 // pred_check_branch
        %375 = sbr.rel (%p372) target = $region68
      $region67: #{tpu_custom_call.1} parent=5 // pred_region
        %s376 = ssub.s32 %s28, 1
        %p377 = scmp.lt.s32.totalorder %s33, 1
        %s378 = scalar_select %p377, %s33, 1
        %s379 = smul.addr %s378, 8
        %s380 = scalar_lea.vmem %s1, %s379
        %p381 = pneg %p54
        %p382 = pneg %p51
        %p383 = pneg %p75
        %p384 = pneg %p72
        %p385 = pneg %p96
        %p386 = pneg %p93
        %p387 = pneg %p117
        %p388 = pneg %p114
        %p389 = pneg %p138
        %p390 = pneg %p135
        %p391 = pneg %p159
        %p392 = pneg %p156
        %p393 = pneg %p180
        %p394 = pneg %p177
        %p395 = pneg %p201
        %p396 = pneg %p198
        %p397 = pneg %p222
        %p398 = pneg %p219
        %p399 = pneg %p243
        %p400 = pneg %p240
        %p401 = pneg %p264
        %p402 = pneg %p261
        %p403 = pneg %p285
        %p404 = pneg %p282
        %p405 = pneg %p311
        %p406 = pneg %p308
        %s407 = sand.u32 %s298, 1
        %s408 = scalar_lea.sflag [#allocation5], %s407
        %s409 = sand.u32 %s298, 1
        %s410 = smul.addr %s409, 8
        %s411 = scalar_lea.vmem [#allocation4], %s410
        %p412 = scmp.lt.s32.totalorder %s33, 1
        %s413 = scalar_select %p412, %s33, 1
        %s414 = smul.addr %s413, 8
        %s415 = scalar_lea.vmem %s1, %s414
        %s416 = sld [smem:[#allocation3 + %s33]]
        %v417 = vld [vmem:[%s415] sm:$0xff]
        %vm418 = vcmask 261120
        %v419 = vsel %vm418, %v417, 0.0
        %420 = vadd.xlane.f32.xlu0 %v419
        %v421 = vpop.xlane.xlu0 %420
        %v422 = vrcp.pop 32.0
        %v423 = vmul.f32 %v421, %v422
        %v424 = vsub.f32 %v417, %v423
        %v425 = vmul.f32 %v424, %v424
        %v426 = vsel %vm418, %v425, 0.0
        %427 = vadd.xlane.f32.xlu0 %v426
        %v428 = vpop.xlane.xlu0 %427
        %v429 = vmul.f32 %v428, %v422
        %v430 = vadd.f32 %v429, 1e-05
        %v431 = vrsqrt.pop %v430
        %v432 = vmul.f32 %v424, %v431
        %v433 = vld [vmem:[%s2] sm:$0x1]
        %v435 = vlaneseq
        %v436 = vshrl.u32 %v435, 7
        %v437 = vsub.s32 0, %v436
        %v438 = vrot.slane %v433, %v437
        %v440 = vmul.f32 %v432, %v438
        %v441 = vld [vmem:[%s3] sm:$0x1]
        %v443 = vlaneseq
        %v444 = vshrl.u32 %v443, 7
        %v445 = vsub.s32 0, %v444
        %v446 = vrot.slane %v441, %v445
        %v448 = vadd.f32 %v440, %v446
        %v449 = vld [vmem:[%s4] sm:$0xff]
        %v450 = vld [vmem:[%s4 + $0x8] sm:$0xff]
        %v451 = vld [vmem:[%s4 + $0x10] sm:$0xff]
        %v452 = vld [vmem:[%s4 + $0x18] sm:$0xff]
        %v453 = vld [vmem:[%s5] sm:$0x1]
        %v455 = vlaneseq
        %v456 = vshrl.u32 %v455, 7
        %v457 = vsub.s32 0, %v456
        %v458 = vrot.slane %v453, %v457
        %v461 = vsel %vm418, %v448, 0
        %463 = vmatprep.subr.mxu0 0.0
        %464 = vmatpush1.msra.mxu0 0.0
        %465 = vmatprep.subr.mxu0 0.0
        %466 = vmatpush1.msra.mxu0 0.0
        %467 = vmatprep.subr.mxu0 0.0
        %468 = vmatpush1.msra.mxu0 0.0
        %469 = vmatprep.subr.mxu0 0.0
        %470 = vmatpush1.msra.mxu0 0.0
        %471 = vmatprep.subr.mxu0 0.0
        %472 = vmatpush1.msra.mxu0 0.0
        %473 = vmatprep.subr.mxu0 0.0
        %474 = vmatpush1.msra.mxu0 0.0
        %475 = vmatprep.subr.mxu0 0.0
        %476 = vmatpush1.msra.mxu0 0.0
        %477 = vmatprep.subr.mxu0 0.0
        %478 = vmatpush1.msra.mxu0 0.0
        %479 = vmatprep.subr.mxu0 0.0
        %480 = vmatpush1.msra.mxu0 0.0
        %481 = vmatprep.subr.mxu0 0.0
        %482 = vmatpush1.msra.mxu0 0.0
        %483 = vmatprep.subr.mxu0 0.0
        %484 = vmatpush1.msra.mxu0 0.0
        %485 = vmatprep.subr.mxu0 0.0
        %486 = vmatpush1.msra.mxu0 0.0
        %487 = vmatprep.subr.mxu0 0.0
        %488 = vmatpush1.msra.mxu0 %v452
        %489 = vmatprep.subr.mxu0 0.0
        %490 = vmatpush1.msra.mxu0 %v451
        %491 = vmatprep.subr.mxu0 0.0
        %492 = vmatpush1.msra.mxu0 %v450
        %493 = vmatprep.subr.mxu0 0.0
        %494 = vmatpush1.msra.mxu0 %v449
        %495 = vmatprep.subr.mxu0 0.0
        %496 = vmatpush2.msra.mxu0 0.0
        %497 = vmatprep.subr.mxu0 0.0
        %498 = vmatpush2.msra.mxu0 0.0
        %499 = vmatprep.subr.mxu0 0.0
        %500 = vmatpush2.msra.mxu0 0.0
        %501 = vmatprep.subr.mxu0 0.0
        %502 = vmatpush2.msra.mxu0 0.0
        %503 = vmatprep.subr.mxu0 0.0
        %504 = vmatpush2.msra.mxu0 0.0
        %505 = vmatprep.subr.mxu0 0.0
        %506 = vmatpush2.msra.mxu0 0.0
        %507 = vmatprep.subr.mxu0 0.0
        %508 = vmatpush2.msra.mxu0 0.0
        %509 = vmatprep.subr.mxu0 0.0
        %510 = vmatpush2.msra.mxu0 0.0
        %511 = vmatprep.subr.mxu0 0.0
        %512 = vmatpush2.msra.mxu0 0.0
        %513 = vmatprep.subr.mxu0 0.0
        %514 = vmatpush2.msra.mxu0 0.0
        %515 = vmatprep.subr.mxu0 0.0
        %516 = vmatpush2.msra.mxu0 0.0
        %517 = vmatprep.subr.mxu0 0.0
        %518 = vmatpush2.msra.mxu0 0.0
        %519 = vmatprep.subr.mxu0 0.0
        %520 = vmatpush2.msra.mxu0 0.0
        %521 = vmatprep.subr.mxu0 0.0
        %522 = vmatpush2.msra.mxu0 0.0
        %523 = vmatprep.subr.mxu0 0.0
        %524 = vmatpush2.msra.mxu0 0.0
        %525 = vmatprep.subr.mxu0 0.0
        %526 = vmatpush2.msra.mxu0 0.0
        %527 = vmatprep.mubr.f32.mxu0 0.0
        %528 = vmatmul.mubr.f32.gmra.mxu0 %v461
        %v529 = vpop.f32.mrf.mxu0
        %v530 = vadd.f32 %v458, %v529
        %v531 = vpop.f32.mrf.mxu0
        %532 = vdwg.mxu0
        %v533 = vld [vmem:[%s6] sm:$0xff]
        %v534 = vld [vmem:[%s6 + $0x8] sm:$0xff]
        %v535 = vld [vmem:[%s6 + $0x10] sm:$0xff]
        %v536 = vld [vmem:[%s6 + $0x18] sm:$0xff]
        %v537 = vld [vmem:[%s7] sm:$0x1]
        %v539 = vlaneseq
        %v540 = vshrl.u32 %v539, 7
        %v541 = vsub.s32 0, %v540
        %v542 = vrot.slane %v537, %v541
        %544 = vmatprep.subr.mxu0 0.0
        %545 = vmatpush1.msra.mxu0 0.0
        %546 = vmatprep.subr.mxu0 0.0
        %547 = vmatpush1.msra.mxu0 0.0
        %548 = vmatprep.subr.mxu0 0.0
        %549 = vmatpush1.msra.mxu0 0.0
        %550 = vmatprep.subr.mxu0 0.0
        %551 = vmatpush1.msra.mxu0 0.0
        %552 = vmatprep.subr.mxu0 0.0
        %553 = vmatpush1.msra.mxu0 0.0
        %554 = vmatprep.subr.mxu0 0.0
        %555 = vmatpush1.msra.mxu0 0.0
        %556 = vmatprep.subr.mxu0 0.0
        %557 = vmatpush1.msra.mxu0 0.0
        %558 = vmatprep.subr.mxu0 0.0
        %559 = vmatpush1.msra.mxu0 0.0
        %560 = vmatprep.subr.mxu0 0.0
        %561 = vmatpush1.msra.mxu0 0.0
        %562 = vmatprep.subr.mxu0 0.0
        %563 = vmatpush1.msra.mxu0 0.0
        %564 = vmatprep.subr.mxu0 0.0
        %565 = vmatpush1.msra.mxu0 0.0
        %566 = vmatprep.subr.mxu0 0.0
        %567 = vmatpush1.msra.mxu0 0.0
        %568 = vmatprep.subr.mxu0 0.0
        %569 = vmatpush1.msra.mxu0 %v536
        %570 = vmatprep.subr.mxu0 0.0
        %571 = vmatpush1.msra.mxu0 %v535
        %572 = vmatprep.subr.mxu0 0.0
        %573 = vmatpush1.msra.mxu0 %v534
        %574 = vmatprep.subr.mxu0 0.0
        %575 = vmatpush1.msra.mxu0 %v533
        %576 = vmatprep.subr.mxu0 0.0
        %577 = vmatpush2.msra.mxu0 0.0
        %578 = vmatprep.subr.mxu0 0.0
        %579 = vmatpush2.msra.mxu0 0.0
        %580 = vmatprep.subr.mxu0 0.0
        %581 = vmatpush2.msra.mxu0 0.0
        %582 = vmatprep.subr.mxu0 0.0
        %583 = vmatpush2.msra.mxu0 0.0
        %584 = vmatprep.subr.mxu0 0.0
        %585 = vmatpush2.msra.mxu0 0.0
        %586 = vmatprep.subr.mxu0 0.0
        %587 = vmatpush2.msra.mxu0 0.0
        %588 = vmatprep.subr.mxu0 0.0
        %589 = vmatpush2.msra.mxu0 0.0
        %590 = vmatprep.subr.mxu0 0.0
        %591 = vmatpush2.msra.mxu0 0.0
        %592 = vmatprep.subr.mxu0 0.0
        %593 = vmatpush2.msra.mxu0 0.0
        %594 = vmatprep.subr.mxu0 0.0
        %595 = vmatpush2.msra.mxu0 0.0
        %596 = vmatprep.subr.mxu0 0.0
        %597 = vmatpush2.msra.mxu0 0.0
        %598 = vmatprep.subr.mxu0 0.0
        %599 = vmatpush2.msra.mxu0 0.0
        %600 = vmatprep.subr.mxu0 0.0
        %601 = vmatpush2.msra.mxu0 0.0
        %602 = vmatprep.subr.mxu0 0.0
        %603 = vmatpush2.msra.mxu0 0.0
        %604 = vmatprep.subr.mxu0 0.0
        %605 = vmatpush2.msra.mxu0 0.0
        %606 = vmatprep.subr.mxu0 0.0
        %607 = vmatpush2.msra.mxu0 0.0
        %608 = vmatprep.mubr.f32.mxu0 0.0
        %609 = vmatmul.mubr.f32.gmra.mxu0 %v461
        %v610 = vpop.f32.mrf.mxu0
        %v611 = vadd.f32 %v542, %v610
        %v612 = vpop.f32.mrf.mxu0
        %613 = vdwg.mxu0
        %v614 = vld [vmem:[%s8] sm:$0xff]
        %v615 = vld [vmem:[%s8 + $0x8] sm:$0xff]
        %v616 = vld [vmem:[%s8 + $0x10] sm:$0xff]
        %v617 = vld [vmem:[%s8 + $0x18] sm:$0xff]
        %v618 = vld [vmem:[%s9] sm:$0x1]
        %v620 = vlaneseq
        %v621 = vshrl.u32 %v620, 7
        %v622 = vsub.s32 0, %v621
        %v623 = vrot.slane %v618, %v622
        %625 = vmatprep.subr.mxu0 0.0
        %626 = vmatpush1.msra.mxu0 0.0
        %627 = vmatprep.subr.mxu0 0.0
        %628 = vmatpush1.msra.mxu0 0.0
        %629 = vmatprep.subr.mxu0 0.0
        %630 = vmatpush1.msra.mxu0 0.0
        %631 = vmatprep.subr.mxu0 0.0
        %632 = vmatpush1.msra.mxu0 0.0
        %633 = vmatprep.subr.mxu0 0.0
        %634 = vmatpush1.msra.mxu0 0.0
        %635 = vmatprep.subr.mxu0 0.0
        %636 = vmatpush1.msra.mxu0 0.0
        %637 = vmatprep.subr.mxu0 0.0
        %638 = vmatpush1.msra.mxu0 0.0
        %639 = vmatprep.subr.mxu0 0.0
        %640 = vmatpush1.msra.mxu0 0.0
        %641 = vmatprep.subr.mxu0 0.0
        %642 = vmatpush1.msra.mxu0 0.0
        %643 = vmatprep.subr.mxu0 0.0
        %644 = vmatpush1.msra.mxu0 0.0
        %645 = vmatprep.subr.mxu0 0.0
        %646 = vmatpush1.msra.mxu0 0.0
        %647 = vmatprep.subr.mxu0 0.0
        %648 = vmatpush1.msra.mxu0 0.0
        %649 = vmatprep.subr.mxu0 0.0
        %650 = vmatpush1.msra.mxu0 %v617
        %651 = vmatprep.subr.mxu0 0.0
        %652 = vmatpush1.msra.mxu0 %v616
        %653 = vmatprep.subr.mxu0 0.0
        %654 = vmatpush1.msra.mxu0 %v615
        %655 = vmatprep.subr.mxu0 0.0
        %656 = vmatpush1.msra.mxu0 %v614
        %657 = vmatprep.subr.mxu0 0.0
        %658 = vmatpush2.msra.mxu0 0.0
        %659 = vmatprep.subr.mxu0 0.0
        %660 = vmatpush2.msra.mxu0 0.0
        %661 = vmatprep.subr.mxu0 0.0
        %662 = vmatpush2.msra.mxu0 0.0
        %663 = vmatprep.subr.mxu0 0.0
        %664 = vmatpush2.msra.mxu0 0.0
        %665 = vmatprep.subr.mxu0 0.0
        %666 = vmatpush2.msra.mxu0 0.0
        %667 = vmatprep.subr.mxu0 0.0
        %668 = vmatpush2.msra.mxu0 0.0
        %669 = vmatprep.subr.mxu0 0.0
        %670 = vmatpush2.msra.mxu0 0.0
        %671 = vmatprep.subr.mxu0 0.0
        %672 = vmatpush2.msra.mxu0 0.0
        %673 = vmatprep.subr.mxu0 0.0
        %674 = vmatpush2.msra.mxu0 0.0
        %675 = vmatprep.subr.mxu0 0.0
        %676 = vmatpush2.msra.mxu0 0.0
        %677 = vmatprep.subr.mxu0 0.0
        %678 = vmatpush2.msra.mxu0 0.0
        %679 = vmatprep.subr.mxu0 0.0
        %680 = vmatpush2.msra.mxu0 0.0
        %681 = vmatprep.subr.mxu0 0.0
        %682 = vmatpush2.msra.mxu0 0.0
        %683 = vmatprep.subr.mxu0 0.0
        %684 = vmatpush2.msra.mxu0 0.0
        %685 = vmatprep.subr.mxu0 0.0
        %686 = vmatpush2.msra.mxu0 0.0
        %687 = vmatprep.subr.mxu0 0.0
        %688 = vmatpush2.msra.mxu0 0.0
        %689 = vmatprep.mubr.f32.mxu0 0.0
        %690 = vmatmul.mubr.f32.gmra.mxu0 %v461
        %v691 = vpop.f32.mrf.mxu0
        %v692 = vadd.f32 %v623, %v691
        %v693 = vpop.f32.mrf.mxu0
        %694 = vdwg.mxu0
        %v695 = vmul.f32 %v530, 0.35355338
        %vm696 = vcmask 64512
        %v698 = vsel %vm696, %v695, 0
        %v701 = vsel %vm696, %v611, 0
        %703 = vmatprep.subr.mxu0 0.0
        %704 = vmatpush1.xpose.msra.mxu0 0.0
        %705 = vmatprep.subr.mxu0 0.0
        %706 = vmatpush1.xpose.msra.mxu0 0.0
        %707 = vmatprep.subr.mxu0 0.0
        %708 = vmatpush1.xpose.msra.mxu0 0.0
        %709 = vmatprep.subr.mxu0 0.0
        %710 = vmatpush1.xpose.msra.mxu0 0.0
        %711 = vmatprep.subr.mxu0 0.0
        %712 = vmatpush1.xpose.msra.mxu0 0.0
        %713 = vmatprep.subr.mxu0 0.0
        %714 = vmatpush1.xpose.msra.mxu0 0.0
        %715 = vmatprep.subr.mxu0 0.0
        %716 = vmatpush1.xpose.msra.mxu0 0.0
        %717 = vmatprep.subr.mxu0 0.0
        %718 = vmatpush1.xpose.msra.mxu0 0.0
        %719 = vmatprep.subr.mxu0 0.0
        %720 = vmatpush1.xpose.msra.mxu0 0.0
        %721 = vmatprep.subr.mxu0 0.0
        %722 = vmatpush1.xpose.msra.mxu0 0.0
        %723 = vmatprep.subr.mxu0 0.0
        %724 = vmatpush1.xpose.msra.mxu0 0.0
        %725 = vmatprep.subr.mxu0 0.0
        %726 = vmatpush1.xpose.msra.mxu0 0.0
        %727 = vmatprep.subr.mxu0 0.0
        %728 = vmatpush1.xpose.msra.mxu0 0.0
        %729 = vmatprep.subr.mxu0 0.0
        %730 = vmatpush1.xpose.msra.mxu0 0.0
        %731 = vmatprep.subr.mxu0 0.0
        %732 = vmatpush1.xpose.msra.mxu0 0.0
        %733 = vmatprep.subr.mxu0 0.0
        %734 = vmatpush1.xpose.msra.mxu0 %v701
        %735 = vmatprep.subr.mxu0 0.0
        %736 = vmatpush2.xpose.msra.mxu0 0.0
        %737 = vmatprep.subr.mxu0 0.0
        %738 = vmatpush2.xpose.msra.mxu0 0.0
        %739 = vmatprep.subr.mxu0 0.0
        %740 = vmatpush2.xpose.msra.mxu0 0.0
        %741 = vmatprep.subr.mxu0 0.0
        %742 = vmatpush2.xpose.msra.mxu0 0.0
        %743 = vmatprep.subr.mxu0 0.0
        %744 = vmatpush2.xpose.msra.mxu0 0.0
        %745 = vmatprep.subr.mxu0 0.0
        %746 = vmatpush2.xpose.msra.mxu0 0.0
        %747 = vmatprep.subr.mxu0 0.0
        %748 = vmatpush2.xpose.msra.mxu0 0.0
        %749 = vmatprep.subr.mxu0 0.0
        %750 = vmatpush2.xpose.msra.mxu0 0.0
        %751 = vmatprep.subr.mxu0 0.0
        %752 = vmatpush2.xpose.msra.mxu0 0.0
        %753 = vmatprep.subr.mxu0 0.0
        %754 = vmatpush2.xpose.msra.mxu0 0.0
        %755 = vmatprep.subr.mxu0 0.0
        %756 = vmatpush2.xpose.msra.mxu0 0.0
        %757 = vmatprep.subr.mxu0 0.0
        %758 = vmatpush2.xpose.msra.mxu0 0.0
        %759 = vmatprep.subr.mxu0 0.0
        %760 = vmatpush2.xpose.msra.mxu0 0.0
        %761 = vmatprep.subr.mxu0 0.0
        %762 = vmatpush2.xpose.msra.mxu0 0.0
        %763 = vmatprep.subr.mxu0 0.0
        %764 = vmatpush2.xpose.msra.mxu0 0.0
        %765 = vmatprep.subr.mxu0 0.0
        %766 = vmatpush2.xpose.msra.mxu0 0.0
        %767 = vmatprep.mubr.f32.mxu0 0.0
        %768 = vmatmul.mubr.f32.gmra.mxu0 %v698
        %v769 = vpop.f32.mrf.mxu0
        %v770 = vadd.f32 0.0, %v769
        %v771 = vpop.f32.mrf.mxu0
        %772 = vdwg.mxu0
        %v773 = vsel %vm696, %v770, -inf
        %774 = vmax.xlane.f32.xlu0 %v773
        %v775 = vpop.xlane.xlu0 %774
        %v776 = vsub.f32 %v770, %v775
        %v777 = vmul.f32 %v776, 1.442695
        %v778 = vpow.pop %v777
        %v779 = vsel %vm696, %v778, 0.0
        %780 = vadd.xlane.f32.xlu0 %v779
        %v781 = vpop.xlane.xlu0 %780
        %v782 = vrcp.pop %v781
        %v783 = vmul.f32 %v778, %v782
        %v785 = vsel %vm696, %v783, 0
        %787 = vmatprep.subr.mxu0 0.0
        %788 = vmatpush1.msra.mxu0 0.0
        %789 = vmatprep.subr.mxu0 0.0
        %790 = vmatpush1.msra.mxu0 0.0
        %791 = vmatprep.subr.mxu0 0.0
        %792 = vmatpush1.msra.mxu0 0.0
        %793 = vmatprep.subr.mxu0 0.0
        %794 = vmatpush1.msra.mxu0 0.0
        %795 = vmatprep.subr.mxu0 0.0
        %796 = vmatpush1.msra.mxu0 0.0
        %797 = vmatprep.subr.mxu0 0.0
        %798 = vmatpush1.msra.mxu0 0.0
        %799 = vmatprep.subr.mxu0 0.0
        %800 = vmatpush1.msra.mxu0 0.0
        %801 = vmatprep.subr.mxu0 0.0
        %802 = vmatpush1.msra.mxu0 0.0
        %803 = vmatprep.subr.mxu0 0.0
        %804 = vmatpush1.msra.mxu0 0.0
        %805 = vmatprep.subr.mxu0 0.0
        %806 = vmatpush1.msra.mxu0 0.0
        %807 = vmatprep.subr.mxu0 0.0
        %808 = vmatpush1.msra.mxu0 0.0
        %809 = vmatprep.subr.mxu0 0.0
        %810 = vmatpush1.msra.mxu0 0.0
        %811 = vmatprep.subr.mxu0 0.0
        %812 = vmatpush1.msra.mxu0 0.0
        %813 = vmatprep.subr.mxu0 0.0
        %814 = vmatpush1.msra.mxu0 0.0
        %815 = vmatprep.subr.mxu0 0.0
        %816 = vmatpush1.msra.mxu0 0.0
        %817 = vmatprep.subr.mxu0 0.0
        %818 = vmatpush1.msra.mxu0 %v692
        %819 = vmatprep.subr.mxu0 0.0
        %820 = vmatpush2.msra.mxu0 0.0
        %821 = vmatprep.subr.mxu0 0.0
        %822 = vmatpush2.msra.mxu0 0.0
        %823 = vmatprep.subr.mxu0 0.0
        %824 = vmatpush2.msra.mxu0 0.0
        %825 = vmatprep.subr.mxu0 0.0
        %826 = vmatpush2.msra.mxu0 0.0
        %827 = vmatprep.subr.mxu0 0.0
        %828 = vmatpush2.msra.mxu0 0.0
        %829 = vmatprep.subr.mxu0 0.0
        %830 = vmatpush2.msra.mxu0 0.0
        %831 = vmatprep.subr.mxu0 0.0
        %832 = vmatpush2.msra.mxu0 0.0
        %833 = vmatprep.subr.mxu0 0.0
        %834 = vmatpush2.msra.mxu0 0.0
        %835 = vmatprep.subr.mxu0 0.0
        %836 = vmatpush2.msra.mxu0 0.0
        %837 = vmatprep.subr.mxu0 0.0
        %838 = vmatpush2.msra.mxu0 0.0
        %839 = vmatprep.subr.mxu0 0.0
        %840 = vmatpush2.msra.mxu0 0.0
        %841 = vmatprep.subr.mxu0 0.0
        %842 = vmatpush2.msra.mxu0 0.0
        %843 = vmatprep.subr.mxu0 0.0
        %844 = vmatpush2.msra.mxu0 0.0
        %845 = vmatprep.subr.mxu0 0.0
        %846 = vmatpush2.msra.mxu0 0.0
        %847 = vmatprep.subr.mxu0 0.0
        %848 = vmatpush2.msra.mxu0 0.0
        %849 = vmatprep.subr.mxu0 0.0
        %850 = vmatpush2.msra.mxu0 0.0
        %851 = vmatprep.mubr.f32.mxu0 0.0
        %852 = vmatmul.mubr.f32.gmra.mxu0 %v785
        %v853 = vpop.f32.mrf.mxu0
        %v854 = vadd.f32 0.0, %v853
        %v855 = vpop.f32.mrf.mxu0
        %856 = vdwg.mxu0
        %v857 = vld [vmem:[%s10] sm:$0xff]
        %s858 = scalar_lea.vmem %s4, 32
        %v859 = vld [vmem:[%s858] sm:$0xff]
        %v860 = vld [vmem:[%s858 + $0x8] sm:$0xff]
        %v861 = vld [vmem:[%s858 + $0x10] sm:$0xff]
        %v862 = vld [vmem:[%s858 + $0x18] sm:$0xff]
        %s863 = scalar_lea.vmem %s5, 1
        %v864 = vld [vmem:[%s863] sm:$0x1]
        %v866 = vlaneseq
        %v867 = vshrl.u32 %v866, 7
        %v868 = vsub.s32 0, %v867
        %v869 = vrot.slane %v864, %v868
        %871 = vmatprep.subr.mxu0 0.0
        %872 = vmatpush1.msra.mxu0 0.0
        %873 = vmatprep.subr.mxu0 0.0
        %874 = vmatpush1.msra.mxu0 0.0
        %875 = vmatprep.subr.mxu0 0.0
        %876 = vmatpush1.msra.mxu0 0.0
        %877 = vmatprep.subr.mxu0 0.0
        %878 = vmatpush1.msra.mxu0 0.0
        %879 = vmatprep.subr.mxu0 0.0
        %880 = vmatpush1.msra.mxu0 0.0
        %881 = vmatprep.subr.mxu0 0.0
        %882 = vmatpush1.msra.mxu0 0.0
        %883 = vmatprep.subr.mxu0 0.0
        %884 = vmatpush1.msra.mxu0 0.0
        %885 = vmatprep.subr.mxu0 0.0
        %886 = vmatpush1.msra.mxu0 0.0
        %887 = vmatprep.subr.mxu0 0.0
        %888 = vmatpush1.msra.mxu0 0.0
        %889 = vmatprep.subr.mxu0 0.0
        %890 = vmatpush1.msra.mxu0 0.0
        %891 = vmatprep.subr.mxu0 0.0
        %892 = vmatpush1.msra.mxu0 0.0
        %893 = vmatprep.subr.mxu0 0.0
        %894 = vmatpush1.msra.mxu0 0.0
        %895 = vmatprep.subr.mxu0 0.0
        %896 = vmatpush1.msra.mxu0 %v862
        %897 = vmatprep.subr.mxu0 0.0
        %898 = vmatpush1.msra.mxu0 %v861
        %899 = vmatprep.subr.mxu0 0.0
        %900 = vmatpush1.msra.mxu0 %v860
        %901 = vmatprep.subr.mxu0 0.0
        %902 = vmatpush1.msra.mxu0 %v859
        %903 = vmatprep.subr.mxu0 0.0
        %904 = vmatpush2.msra.mxu0 0.0
        %905 = vmatprep.subr.mxu0 0.0
        %906 = vmatpush2.msra.mxu0 0.0
        %907 = vmatprep.subr.mxu0 0.0
        %908 = vmatpush2.msra.mxu0 0.0
        %909 = vmatprep.subr.mxu0 0.0
        %910 = vmatpush2.msra.mxu0 0.0
        %911 = vmatprep.subr.mxu0 0.0
        %912 = vmatpush2.msra.mxu0 0.0
        %913 = vmatprep.subr.mxu0 0.0
        %914 = vmatpush2.msra.mxu0 0.0
        %915 = vmatprep.subr.mxu0 0.0
        %916 = vmatpush2.msra.mxu0 0.0
        %917 = vmatprep.subr.mxu0 0.0
        %918 = vmatpush2.msra.mxu0 0.0
        %919 = vmatprep.subr.mxu0 0.0
        %920 = vmatpush2.msra.mxu0 0.0
        %921 = vmatprep.subr.mxu0 0.0
        %922 = vmatpush2.msra.mxu0 0.0
        %923 = vmatprep.subr.mxu0 0.0
        %924 = vmatpush2.msra.mxu0 0.0
        %925 = vmatprep.subr.mxu0 0.0
        %926 = vmatpush2.msra.mxu0 0.0
        %927 = vmatprep.subr.mxu0 0.0
        %928 = vmatpush2.msra.mxu0 0.0
        %929 = vmatprep.subr.mxu0 0.0
        %930 = vmatpush2.msra.mxu0 0.0
        %931 = vmatprep.subr.mxu0 0.0
        %932 = vmatpush2.msra.mxu0 0.0
        %933 = vmatprep.subr.mxu0 0.0
        %934 = vmatpush2.msra.mxu0 0.0
        %935 = vmatprep.mubr.f32.mxu0 0.0
        %936 = vmatmul.mubr.f32.gmra.mxu0 %v461
        %v937 = vpop.f32.mrf.mxu0
        %v938 = vadd.f32 %v869, %v937
        %v939 = vpop.f32.mrf.mxu0
        %940 = vdwg.mxu0
        %s941 = scalar_lea.vmem %s6, 32
        %v942 = vld [vmem:[%s941] sm:$0xff]
        %v943 = vld [vmem:[%s941 + $0x8] sm:$0xff]
        %v944 = vld [vmem:[%s941 + $0x10] sm:$0xff]
        %v945 = vld [vmem:[%s941 + $0x18] sm:$0xff]
        %s946 = scalar_lea.vmem %s7, 1
        %v947 = vld [vmem:[%s946] sm:$0x1]
        %v949 = vlaneseq
        %v950 = vshrl.u32 %v949, 7
        %v951 = vsub.s32 0, %v950
        %v952 = vrot.slane %v947, %v951
        %954 = vmatprep.subr.mxu0 0.0
        %955 = vmatpush1.msra.mxu0 0.0
        %956 = vmatprep.subr.mxu0 0.0
        %957 = vmatpush1.msra.mxu0 0.0
        %958 = vmatprep.subr.mxu0 0.0
        %959 = vmatpush1.msra.mxu0 0.0
        %960 = vmatprep.subr.mxu0 0.0
        %961 = vmatpush1.msra.mxu0 0.0
        %962 = vmatprep.subr.mxu0 0.0
        %963 = vmatpush1.msra.mxu0 0.0
        %964 = vmatprep.subr.mxu0 0.0
        %965 = vmatpush1.msra.mxu0 0.0
        %966 = vmatprep.subr.mxu0 0.0
        %967 = vmatpush1.msra.mxu0 0.0
        %968 = vmatprep.subr.mxu0 0.0
        %969 = vmatpush1.msra.mxu0 0.0
        %970 = vmatprep.subr.mxu0 0.0
        %971 = vmatpush1.msra.mxu0 0.0
        %972 = vmatprep.subr.mxu0 0.0
        %973 = vmatpush1.msra.mxu0 0.0
        %974 = vmatprep.subr.mxu0 0.0
        %975 = vmatpush1.msra.mxu0 0.0
        %976 = vmatprep.subr.mxu0 0.0
        %977 = vmatpush1.msra.mxu0 0.0
        %978 = vmatprep.subr.mxu0 0.0
        %979 = vmatpush1.msra.mxu0 %v945
        %980 = vmatprep.subr.mxu0 0.0
        %981 = vmatpush1.msra.mxu0 %v944
        %982 = vmatprep.subr.mxu0 0.0
        %983 = vmatpush1.msra.mxu0 %v943
        %984 = vmatprep.subr.mxu0 0.0
        %985 = vmatpush1.msra.mxu0 %v942
        %986 = vmatprep.subr.mxu0 0.0
        %987 = vmatpush2.msra.mxu0 0.0
        %988 = vmatprep.subr.mxu0 0.0
        %989 = vmatpush2.msra.mxu0 0.0
        %990 = vmatprep.subr.mxu0 0.0
        %991 = vmatpush2.msra.mxu0 0.0
        %992 = vmatprep.subr.mxu0 0.0
        %993 = vmatpush2.msra.mxu0 0.0
        %994 = vmatprep.subr.mxu0 0.0
        %995 = vmatpush2.msra.mxu0 0.0
        %996 = vmatprep.subr.mxu0 0.0
        %997 = vmatpush2.msra.mxu0 0.0
        %998 = vmatprep.subr.mxu0 0.0
        %999 = vmatpush2.msra.mxu0 0.0
        %1000 = vmatprep.subr.mxu0 0.0
        %1001 = vmatpush2.msra.mxu0 0.0
        %1002 = vmatprep.subr.mxu0 0.0
        %1003 = vmatpush2.msra.mxu0 0.0
        %1004 = vmatprep.subr.mxu0 0.0
        %1005 = vmatpush2.msra.mxu0 0.0
        %1006 = vmatprep.subr.mxu0 0.0
        %1007 = vmatpush2.msra.mxu0 0.0
        %1008 = vmatprep.subr.mxu0 0.0
        %1009 = vmatpush2.msra.mxu0 0.0
        %1010 = vmatprep.subr.mxu0 0.0
        %1011 = vmatpush2.msra.mxu0 0.0
        %1012 = vmatprep.subr.mxu0 0.0
        %1013 = vmatpush2.msra.mxu0 0.0
        %1014 = vmatprep.subr.mxu0 0.0
        %1015 = vmatpush2.msra.mxu0 0.0
        %1016 = vmatprep.subr.mxu0 0.0
        %1017 = vmatpush2.msra.mxu0 0.0
        %1018 = vmatprep.mubr.f32.mxu0 0.0
        %1019 = vmatmul.mubr.f32.gmra.mxu0 %v461
        %v1020 = vpop.f32.mrf.mxu0
        %v1021 = vadd.f32 %v952, %v1020
        %v1022 = vpop.f32.mrf.mxu0
        %1023 = vdwg.mxu0
        %s1024 = scalar_lea.vmem %s8, 32
        %v1025 = vld [vmem:[%s1024] sm:$0xff]
        %v1026 = vld [vmem:[%s1024 + $0x8] sm:$0xff]
        %v1027 = vld [vmem:[%s1024 + $0x10] sm:$0xff]
        %v1028 = vld [vmem:[%s1024 + $0x18] sm:$0xff]
        %s1029 = scalar_lea.vmem %s9, 1
        %v1030 = vld [vmem:[%s1029] sm:$0x1]
        %v1032 = vlaneseq
        %v1033 = vshrl.u32 %v1032, 7
        %v1034 = vsub.s32 0, %v1033
        %v1035 = vrot.slane %v1030, %v1034
        %1037 = vmatprep.subr.mxu0 0.0
        %1038 = vmatpush1.msra.mxu0 0.0
        %1039 = vmatprep.subr.mxu0 0.0
        %1040 = vmatpush1.msra.mxu0 0.0
        %1041 = vmatprep.subr.mxu0 0.0
        %1042 = vmatpush1.msra.mxu0 0.0
        %1043 = vmatprep.subr.mxu0 0.0
        %1044 = vmatpush1.msra.mxu0 0.0
        %1045 = vmatprep.subr.mxu0 0.0
        %1046 = vmatpush1.msra.mxu0 0.0
        %1047 = vmatprep.subr.mxu0 0.0
        %1048 = vmatpush1.msra.mxu0 0.0
        %1049 = vmatprep.subr.mxu0 0.0
        %1050 = vmatpush1.msra.mxu0 0.0
        %1051 = vmatprep.subr.mxu0 0.0
        %1052 = vmatpush1.msra.mxu0 0.0
        %1053 = vmatprep.subr.mxu0 0.0
        %1054 = vmatpush1.msra.mxu0 0.0
        %1055 = vmatprep.subr.mxu0 0.0
        %1056 = vmatpush1.msra.mxu0 0.0
        %1057 = vmatprep.subr.mxu0 0.0
        %1058 = vmatpush1.msra.mxu0 0.0
        %1059 = vmatprep.subr.mxu0 0.0
        %1060 = vmatpush1.msra.mxu0 0.0
        %1061 = vmatprep.subr.mxu0 0.0
        %1062 = vmatpush1.msra.mxu0 %v1028
        %1063 = vmatprep.subr.mxu0 0.0
        %1064 = vmatpush1.msra.mxu0 %v1027
        %1065 = vmatprep.subr.mxu0 0.0
        %1066 = vmatpush1.msra.mxu0 %v1026
        %1067 = vmatprep.subr.mxu0 0.0
        %1068 = vmatpush1.msra.mxu0 %v1025
        %1069 = vmatprep.subr.mxu0 0.0
        %1070 = vmatpush2.msra.mxu0 0.0
        %1071 = vmatprep.subr.mxu0 0.0
        %1072 = vmatpush2.msra.mxu0 0.0
        %1073 = vmatprep.subr.mxu0 0.0
        %1074 = vmatpush2.msra.mxu0 0.0
        %1075 = vmatprep.subr.mxu0 0.0
        %1076 = vmatpush2.msra.mxu0 0.0
        %1077 = vmatprep.subr.mxu0 0.0
        %1078 = vmatpush2.msra.mxu0 0.0
        %1079 = vmatprep.subr.mxu0 0.0
        %1080 = vmatpush2.msra.mxu0 0.0
        %1081 = vmatprep.subr.mxu0 0.0
        %1082 = vmatpush2.msra.mxu0 0.0
        %1083 = vmatprep.subr.mxu0 0.0
        %1084 = vmatpush2.msra.mxu0 0.0
        %1085 = vmatprep.subr.mxu0 0.0
        %1086 = vmatpush2.msra.mxu0 0.0
        %1087 = vmatprep.subr.mxu0 0.0
        %1088 = vmatpush2.msra.mxu0 0.0
        %1089 = vmatprep.subr.mxu0 0.0
        %1090 = vmatpush2.msra.mxu0 0.0
        %1091 = vmatprep.subr.mxu0 0.0
        %1092 = vmatpush2.msra.mxu0 0.0
        %1093 = vmatprep.subr.mxu0 0.0
        %1094 = vmatpush2.msra.mxu0 0.0
        %1095 = vmatprep.subr.mxu0 0.0
        %1096 = vmatpush2.msra.mxu0 0.0
        %1097 = vmatprep.subr.mxu0 0.0
        %1098 = vmatpush2.msra.mxu0 0.0
        %1099 = vmatprep.subr.mxu0 0.0
        %1100 = vmatpush2.msra.mxu0 0.0
        %1101 = vmatprep.mubr.f32.mxu0 0.0
        %1102 = vmatmul.mubr.f32.gmra.mxu0 %v461
        %v1103 = vpop.f32.mrf.mxu0
        %v1104 = vadd.f32 %v1035, %v1103
        %v1105 = vpop.f32.mrf.mxu0
        %1106 = vdwg.mxu0
        %v1107 = vmul.f32 %v938, 0.35355338
        %v1109 = vsel %vm696, %v1107, 0
        %v1112 = vsel %vm696, %v1021, 0
        %1114 = vmatprep.subr.mxu0 0.0
        %1115 = vmatpush1.xpose.msra.mxu0 0.0
        %1116 = vmatprep.subr.mxu0 0.0
        %1117 = vmatpush1.xpose.msra.mxu0 0.0
        %1118 = vmatprep.subr.mxu0 0.0
        %1119 = vmatpush1.xpose.msra.mxu0 0.0
        %1120 = vmatprep.subr.mxu0 0.0
        %1121 = vmatpush1.xpose.msra.mxu0 0.0
        %1122 = vmatprep.subr.mxu0 0.0
        %1123 = vmatpush1.xpose.msra.mxu0 0.0
        %1124 = vmatprep.subr.mxu0 0.0
        %1125 = vmatpush1.xpose.msra.mxu0 0.0
        %1126 = vmatprep.subr.mxu0 0.0
        %1127 = vmatpush1.xpose.msra.mxu0 0.0
        %1128 = vmatprep.subr.mxu0 0.0
        %1129 = vmatpush1.xpose.msra.mxu0 0.0
        %1130 = vmatprep.subr.mxu0 0.0
        %1131 = vmatpush1.xpose.msra.mxu0 0.0
        %1132 = vmatprep.subr.mxu0 0.0
        %1133 = vmatpush1.xpose.msra.mxu0 0.0
        %1134 = vmatprep.subr.mxu0 0.0
        %1135 = vmatpush1.xpose.msra.mxu0 0.0
        %1136 = vmatprep.subr.mxu0 0.0
        %1137 = vmatpush1.xpose.msra.mxu0 0.0
        %1138 = vmatprep.subr.mxu0 0.0
        %1139 = vmatpush1.xpose.msra.mxu0 0.0
        %1140 = vmatprep.subr.mxu0 0.0
        %1141 = vmatpush1.xpose.msra.mxu0 0.0
        %1142 = vmatprep.subr.mxu0 0.0
        %1143 = vmatpush1.xpose.msra.mxu0 0.0
        %1144 = vmatprep.subr.mxu0 0.0
        %1145 = vmatpush1.xpose.msra.mxu0 %v1112
        %1146 = vmatprep.subr.mxu0 0.0
        %1147 = vmatpush2.xpose.msra.mxu0 0.0
        %1148 = vmatprep.subr.mxu0 0.0
        %1149 = vmatpush2.xpose.msra.mxu0 0.0
        %1150 = vmatprep.subr.mxu0 0.0
        %1151 = vmatpush2.xpose.msra.mxu0 0.0
        %1152 = vmatprep.subr.mxu0 0.0
        %1153 = vmatpush2.xpose.msra.mxu0 0.0
        %1154 = vmatprep.subr.mxu0 0.0
        %1155 = vmatpush2.xpose.msra.mxu0 0.0
        %1156 = vmatprep.subr.mxu0 0.0
        %1157 = vmatpush2.xpose.msra.mxu0 0.0
        %1158 = vmatprep.subr.mxu0 0.0
        %1159 = vmatpush2.xpose.msra.mxu0 0.0
        %1160 = vmatprep.subr.mxu0 0.0
        %1161 = vmatpush2.xpose.msra.mxu0 0.0
        %1162 = vmatprep.subr.mxu0 0.0
        %1163 = vmatpush2.xpose.msra.mxu0 0.0
        %1164 = vmatprep.subr.mxu0 0.0
        %1165 = vmatpush2.xpose.msra.mxu0 0.0
        %1166 = vmatprep.subr.mxu0 0.0
        %1167 = vmatpush2.xpose.msra.mxu0 0.0
        %1168 = vmatprep.subr.mxu0 0.0
        %1169 = vmatpush2.xpose.msra.mxu0 0.0
        %1170 = vmatprep.subr.mxu0 0.0
        %1171 = vmatpush2.xpose.msra.mxu0 0.0
        %1172 = vmatprep.subr.mxu0 0.0
        %1173 = vmatpush2.xpose.msra.mxu0 0.0
        %1174 = vmatprep.subr.mxu0 0.0
        %1175 = vmatpush2.xpose.msra.mxu0 0.0
        %1176 = vmatprep.subr.mxu0 0.0
        %1177 = vmatpush2.xpose.msra.mxu0 0.0
        %1178 = vmatprep.mubr.f32.mxu0 0.0
        %1179 = vmatmul.mubr.f32.gmra.mxu0 %v1109
        %v1180 = vpop.f32.mrf.mxu0
        %v1181 = vadd.f32 0.0, %v1180
        %v1182 = vpop.f32.mrf.mxu0
        %1183 = vdwg.mxu0
        %v1184 = vsel %vm696, %v1181, -inf
        %1185 = vmax.xlane.f32.xlu0 %v1184
        %v1186 = vpop.xlane.xlu0 %1185
        %v1187 = vsub.f32 %v1181, %v1186
        %v1188 = vmul.f32 %v1187, 1.442695
        %v1189 = vpow.pop %v1188
        %v1190 = vsel %vm696, %v1189, 0.0
        %1191 = vadd.xlane.f32.xlu0 %v1190
        %v1192 = vpop.xlane.xlu0 %1191
        %v1193 = vrcp.pop %v1192
        %v1194 = vmul.f32 %v1189, %v1193
        %v1196 = vsel %vm696, %v1194, 0
        %1198 = vmatprep.subr.mxu0 0.0
        %1199 = vmatpush1.msra.mxu0 0.0
        %1200 = vmatprep.subr.mxu0 0.0
        %1201 = vmatpush1.msra.mxu0 0.0
        %1202 = vmatprep.subr.mxu0 0.0
        %1203 = vmatpush1.msra.mxu0 0.0
        %1204 = vmatprep.subr.mxu0 0.0
        %1205 = vmatpush1.msra.mxu0 0.0
        %1206 = vmatprep.subr.mxu0 0.0
        %1207 = vmatpush1.msra.mxu0 0.0
        %1208 = vmatprep.subr.mxu0 0.0
        %1209 = vmatpush1.msra.mxu0 0.0
        %1210 = vmatprep.subr.mxu0 0.0
        %1211 = vmatpush1.msra.mxu0 0.0
        %1212 = vmatprep.subr.mxu0 0.0
        %1213 = vmatpush1.msra.mxu0 0.0
        %1214 = vmatprep.subr.mxu0 0.0
        %1215 = vmatpush1.msra.mxu0 0.0
        %1216 = vmatprep.subr.mxu0 0.0
        %1217 = vmatpush1.msra.mxu0 0.0
        %1218 = vmatprep.subr.mxu0 0.0
        %1219 = vmatpush1.msra.mxu0 0.0
        %1220 = vmatprep.subr.mxu0 0.0
        %1221 = vmatpush1.msra.mxu0 0.0
        %1222 = vmatprep.subr.mxu0 0.0
        %1223 = vmatpush1.msra.mxu0 0.0
        %1224 = vmatprep.subr.mxu0 0.0
        %1225 = vmatpush1.msra.mxu0 0.0
        %1226 = vmatprep.subr.mxu0 0.0
        %1227 = vmatpush1.msra.mxu0 0.0
        %1228 = vmatprep.subr.mxu0 0.0
        %1229 = vmatpush1.msra.mxu0 %v1104
        %1230 = vmatprep.subr.mxu0 0.0
        %1231 = vmatpush2.msra.mxu0 0.0
        %1232 = vmatprep.subr.mxu0 0.0
        %1233 = vmatpush2.msra.mxu0 0.0
        %1234 = vmatprep.subr.mxu0 0.0
        %1235 = vmatpush2.msra.mxu0 0.0
        %1236 = vmatprep.subr.mxu0 0.0
        %1237 = vmatpush2.msra.mxu0 0.0
        %1238 = vmatprep.subr.mxu0 0.0
        %1239 = vmatpush2.msra.mxu0 0.0
        %1240 = vmatprep.subr.mxu0 0.0
        %1241 = vmatpush2.msra.mxu0 0.0
        %1242 = vmatprep.subr.mxu0 0.0
        %1243 = vmatpush2.msra.mxu0 0.0
        %1244 = vmatprep.subr.mxu0 0.0
        %1245 = vmatpush2.msra.mxu0 0.0
        %1246 = vmatprep.subr.mxu0 0.0
        %1247 = vmatpush2.msra.mxu0 0.0
        %1248 = vmatprep.subr.mxu0 0.0
        %1249 = vmatpush2.msra.mxu0 0.0
        %1250 = vmatprep.subr.mxu0 0.0
        %1251 = vmatpush2.msra.mxu0 0.0
        %1252 = vmatprep.subr.mxu0 0.0
        %1253 = vmatpush2.msra.mxu0 0.0
        %1254 = vmatprep.subr.mxu0 0.0
        %1255 = vmatpush2.msra.mxu0 0.0
        %1256 = vmatprep.subr.mxu0 0.0
        %1257 = vmatpush2.msra.mxu0 0.0
        %1258 = vmatprep.subr.mxu0 0.0
        %1259 = vmatpush2.msra.mxu0 0.0
        %1260 = vmatprep.subr.mxu0 0.0
        %1261 = vmatpush2.msra.mxu0 0.0
        %1262 = vmatprep.mubr.f32.mxu0 0.0
        %1263 = vmatmul.mubr.f32.gmra.mxu0 %v1196
        %v1264 = vpop.f32.mrf.mxu0
        %v1265 = vadd.f32 0.0, %v1264
        %v1266 = vpop.f32.mrf.mxu0
        %1267 = vdwg.mxu0
        %s1268 = scalar_lea.vmem %s10, 8
        %v1269 = vld [vmem:[%s1268] sm:$0xff]
        %v1271 = vsel %vm696, %v1265, 0
        %1273 = vmatprep.subr.mxu0 0.0
        %1274 = vmatpush1.msra.mxu0 0.0
        %1275 = vmatprep.subr.mxu0 0.0
        %1276 = vmatpush1.msra.mxu0 0.0
        %1277 = vmatprep.subr.mxu0 0.0
        %1278 = vmatpush1.msra.mxu0 0.0
        %1279 = vmatprep.subr.mxu0 0.0
        %1280 = vmatpush1.msra.mxu0 0.0
        %1281 = vmatprep.subr.mxu0 0.0
        %1282 = vmatpush1.msra.mxu0 0.0
        %1283 = vmatprep.subr.mxu0 0.0
        %1284 = vmatpush1.msra.mxu0 0.0
        %1285 = vmatprep.subr.mxu0 0.0
        %1286 = vmatpush1.msra.mxu0 0.0
        %1287 = vmatprep.subr.mxu0 0.0
        %1288 = vmatpush1.msra.mxu0 0.0
        %1289 = vmatprep.subr.mxu0 0.0
        %1290 = vmatpush1.msra.mxu0 0.0
        %1291 = vmatprep.subr.mxu0 0.0
        %1292 = vmatpush1.msra.mxu0 0.0
        %1293 = vmatprep.subr.mxu0 0.0
        %1294 = vmatpush1.msra.mxu0 0.0
        %1295 = vmatprep.subr.mxu0 0.0
        %1296 = vmatpush1.msra.mxu0 0.0
        %1297 = vmatprep.subr.mxu0 0.0
        %1298 = vmatpush1.msra.mxu0 0.0
        %1299 = vmatprep.subr.mxu0 0.0
        %1300 = vmatpush1.msra.mxu0 0.0
        %1301 = vmatprep.subr.mxu0 0.0
        %1302 = vmatpush1.msra.mxu0 0.0
        %1303 = vmatprep.subr.mxu0 0.0
        %1304 = vmatpush1.msra.mxu0 %v1269
        %1305 = vmatprep.subr.mxu0 0.0
        %1306 = vmatpush2.msra.mxu0 0.0
        %1307 = vmatprep.subr.mxu0 0.0
        %1308 = vmatpush2.msra.mxu0 0.0
        %1309 = vmatprep.subr.mxu0 0.0
        %1310 = vmatpush2.msra.mxu0 0.0
        %1311 = vmatprep.subr.mxu0 0.0
        %1312 = vmatpush2.msra.mxu0 0.0
        %1313 = vmatprep.subr.mxu0 0.0
        %1314 = vmatpush2.msra.mxu0 0.0
        %1315 = vmatprep.subr.mxu0 0.0
        %1316 = vmatpush2.msra.mxu0 0.0
        %1317 = vmatprep.subr.mxu0 0.0
        %1318 = vmatpush2.msra.mxu0 0.0
        %1319 = vmatprep.subr.mxu0 0.0
        %1320 = vmatpush2.msra.mxu0 0.0
        %1321 = vmatprep.subr.mxu0 0.0
        %1322 = vmatpush2.msra.mxu0 0.0
        %1323 = vmatprep.subr.mxu0 0.0
        %1324 = vmatpush2.msra.mxu0 0.0
        %1325 = vmatprep.subr.mxu0 0.0
        %1326 = vmatpush2.msra.mxu0 0.0
        %1327 = vmatprep.subr.mxu0 0.0
        %1328 = vmatpush2.msra.mxu0 0.0
        %1329 = vmatprep.subr.mxu0 0.0
        %1330 = vmatpush2.msra.mxu0 0.0
        %1331 = vmatprep.subr.mxu0 0.0
        %1332 = vmatpush2.msra.mxu0 0.0
        %1333 = vmatprep.subr.mxu0 0.0
        %1334 = vmatpush2.msra.mxu0 0.0
        %1335 = vmatprep.subr.mxu0 0.0
        %1336 = vmatpush2.msra.mxu0 0.0
        %1337 = vmatprep.mubr.f32.mxu0 0.0
        %1338 = vmatmul.mubr.f32.gmra.mxu0 %v1271
        %v1339 = vpop.f32.mrf.mxu0
        %v1340 = vadd.f32 0.0, %v1339
        %v1341 = vpop.f32.mrf.mxu0
        %1342 = vdwg.mxu0
        %v1344 = vsel %vm696, %v854, 0
        %1346 = vmatprep.subr.mxu0 0.0
        %1347 = vmatpush1.msra.mxu0 0.0
        %1348 = vmatprep.subr.mxu0 0.0
        %1349 = vmatpush1.msra.mxu0 0.0
        %1350 = vmatprep.subr.mxu0 0.0
        %1351 = vmatpush1.msra.mxu0 0.0
        %1352 = vmatprep.subr.mxu0 0.0
        %1353 = vmatpush1.msra.mxu0 0.0
        %1354 = vmatprep.subr.mxu0 0.0
        %1355 = vmatpush1.msra.mxu0 0.0
        %1356 = vmatprep.subr.mxu0 0.0
        %1357 = vmatpush1.msra.mxu0 0.0
        %1358 = vmatprep.subr.mxu0 0.0
        %1359 = vmatpush1.msra.mxu0 0.0
        %1360 = vmatprep.subr.mxu0 0.0
        %1361 = vmatpush1.msra.mxu0 0.0
        %1362 = vmatprep.subr.mxu0 0.0
        %1363 = vmatpush1.msra.mxu0 0.0
        %1364 = vmatprep.subr.mxu0 0.0
        %1365 = vmatpush1.msra.mxu0 0.0
        %1366 = vmatprep.subr.mxu0 0.0
        %1367 = vmatpush1.msra.mxu0 0.0
        %1368 = vmatprep.subr.mxu0 0.0
        %1369 = vmatpush1.msra.mxu0 0.0
        %1370 = vmatprep.subr.mxu0 0.0
        %1371 = vmatpush1.msra.mxu0 0.0
        %1372 = vmatprep.subr.mxu0 0.0
        %1373 = vmatpush1.msra.mxu0 0.0
        %1374 = vmatprep.subr.mxu0 0.0
        %1375 = vmatpush1.msra.mxu0 0.0
        %1376 = vmatprep.subr.mxu0 0.0
        %1377 = vmatpush1.msra.mxu0 %v857
        %1378 = vmatprep.subr.mxu0 0.0
        %1379 = vmatpush2.msra.mxu0 0.0
        %1380 = vmatprep.subr.mxu0 0.0
        %1381 = vmatpush2.msra.mxu0 0.0
        %1382 = vmatprep.subr.mxu0 0.0
        %1383 = vmatpush2.msra.mxu0 0.0
        %1384 = vmatprep.subr.mxu0 0.0
        %1385 = vmatpush2.msra.mxu0 0.0
        %1386 = vmatprep.subr.mxu0 0.0
        %1387 = vmatpush2.msra.mxu0 0.0
        %1388 = vmatprep.subr.mxu0 0.0
        %1389 = vmatpush2.msra.mxu0 0.0
        %1390 = vmatprep.subr.mxu0 0.0
        %1391 = vmatpush2.msra.mxu0 0.0
        %1392 = vmatprep.subr.mxu0 0.0
        %1393 = vmatpush2.msra.mxu0 0.0
        %1394 = vmatprep.subr.mxu0 0.0
        %1395 = vmatpush2.msra.mxu0 0.0
        %1396 = vmatprep.subr.mxu0 0.0
        %1397 = vmatpush2.msra.mxu0 0.0
        %1398 = vmatprep.subr.mxu0 0.0
        %1399 = vmatpush2.msra.mxu0 0.0
        %1400 = vmatprep.subr.mxu0 0.0
        %1401 = vmatpush2.msra.mxu0 0.0
        %1402 = vmatprep.subr.mxu0 0.0
        %1403 = vmatpush2.msra.mxu0 0.0
        %1404 = vmatprep.subr.mxu0 0.0
        %1405 = vmatpush2.msra.mxu0 0.0
        %1406 = vmatprep.subr.mxu0 0.0
        %1407 = vmatpush2.msra.mxu0 0.0
        %1408 = vmatprep.subr.mxu0 0.0
        %1409 = vmatpush2.msra.mxu0 0.0
        %1410 = vmatprep.mubr.f32.mxu0 0.0
        %1411 = vmatmul.mubr.f32.gmra.mxu0 %v1344
        %v1412 = vpop.f32.mrf.mxu0
        %v1413 = vadd.f32 %v1340, %v1412
        %v1414 = vpop.f32.mrf.mxu0
        %1415 = vdwg.mxu0
        %s1416 = scalar_lea.vmem %s4, 64
        %v1417 = vld [vmem:[%s1416] sm:$0xff]
        %v1418 = vld [vmem:[%s1416 + $0x8] sm:$0xff]
        %v1419 = vld [vmem:[%s1416 + $0x10] sm:$0xff]
        %v1420 = vld [vmem:[%s1416 + $0x18] sm:$0xff]
        %s1421 = scalar_lea.vmem %s5, 2
        %v1422 = vld [vmem:[%s1421] sm:$0x1]
        %v1424 = vlaneseq
        %v1425 = vshrl.u32 %v1424, 7
        %v1426 = vsub.s32 0, %v1425
        %v1427 = vrot.slane %v1422, %v1426
        %1429 = vmatprep.subr.mxu0 0.0
        %1430 = vmatpush1.msra.mxu0 0.0
        %1431 = vmatprep.subr.mxu0 0.0
        %1432 = vmatpush1.msra.mxu0 0.0
        %1433 = vmatprep.subr.mxu0 0.0
        %1434 = vmatpush1.msra.mxu0 0.0
        %1435 = vmatprep.subr.mxu0 0.0
        %1436 = vmatpush1.msra.mxu0 0.0
        %1437 = vmatprep.subr.mxu0 0.0
        %1438 = vmatpush1.msra.mxu0 0.0
        %1439 = vmatprep.subr.mxu0 0.0
        %1440 = vmatpush1.msra.mxu0 0.0
        %1441 = vmatprep.subr.mxu0 0.0
        %1442 = vmatpush1.msra.mxu0 0.0
        %1443 = vmatprep.subr.mxu0 0.0
        %1444 = vmatpush1.msra.mxu0 0.0
        %1445 = vmatprep.subr.mxu0 0.0
        %1446 = vmatpush1.msra.mxu0 0.0
        %1447 = vmatprep.subr.mxu0 0.0
        %1448 = vmatpush1.msra.mxu0 0.0
        %1449 = vmatprep.subr.mxu0 0.0
        %1450 = vmatpush1.msra.mxu0 0.0
        %1451 = vmatprep.subr.mxu0 0.0
        %1452 = vmatpush1.msra.mxu0 0.0
        %1453 = vmatprep.subr.mxu0 0.0
        %1454 = vmatpush1.msra.mxu0 %v1420
        %1455 = vmatprep.subr.mxu0 0.0
        %1456 = vmatpush1.msra.mxu0 %v1419
        %1457 = vmatprep.subr.mxu0 0.0
        %1458 = vmatpush1.msra.mxu0 %v1418
        %1459 = vmatprep.subr.mxu0 0.0
        %1460 = vmatpush1.msra.mxu0 %v1417
        %1461 = vmatprep.subr.mxu0 0.0
        %1462 = vmatpush2.msra.mxu0 0.0
        %1463 = vmatprep.subr.mxu0 0.0
        %1464 = vmatpush2.msra.mxu0 0.0
        %1465 = vmatprep.subr.mxu0 0.0
        %1466 = vmatpush2.msra.mxu0 0.0
        %1467 = vmatprep.subr.mxu0 0.0
        %1468 = vmatpush2.msra.mxu0 0.0
        %1469 = vmatprep.subr.mxu0 0.0
        %1470 = vmatpush2.msra.mxu0 0.0
        %1471 = vmatprep.subr.mxu0 0.0
        %1472 = vmatpush2.msra.mxu0 0.0
        %1473 = vmatprep.subr.mxu0 0.0
        %1474 = vmatpush2.msra.mxu0 0.0
        %1475 = vmatprep.subr.mxu0 0.0
        %1476 = vmatpush2.msra.mxu0 0.0
        %1477 = vmatprep.subr.mxu0 0.0
        %1478 = vmatpush2.msra.mxu0 0.0
        %1479 = vmatprep.subr.mxu0 0.0
        %1480 = vmatpush2.msra.mxu0 0.0
        %1481 = vmatprep.subr.mxu0 0.0
        %1482 = vmatpush2.msra.mxu0 0.0
        %1483 = vmatprep.subr.mxu0 0.0
        %1484 = vmatpush2.msra.mxu0 0.0
        %1485 = vmatprep.subr.mxu0 0.0
        %1486 = vmatpush2.msra.mxu0 0.0
        %1487 = vmatprep.subr.mxu0 0.0
        %1488 = vmatpush2.msra.mxu0 0.0
        %1489 = vmatprep.subr.mxu0 0.0
        %1490 = vmatpush2.msra.mxu0 0.0
        %1491 = vmatprep.subr.mxu0 0.0
        %1492 = vmatpush2.msra.mxu0 0.0
        %1493 = vmatprep.mubr.f32.mxu0 0.0
        %1494 = vmatmul.mubr.f32.gmra.mxu0 %v461
        %v1495 = vpop.f32.mrf.mxu0
        %v1496 = vadd.f32 %v1427, %v1495
        %v1497 = vpop.f32.mrf.mxu0
        %1498 = vdwg.mxu0
        %s1499 = scalar_lea.vmem %s6, 64
        %v1500 = vld [vmem:[%s1499] sm:$0xff]
        %v1501 = vld [vmem:[%s1499 + $0x8] sm:$0xff]
        %v1502 = vld [vmem:[%s1499 + $0x10] sm:$0xff]
        %v1503 = vld [vmem:[%s1499 + $0x18] sm:$0xff]
        %s1504 = scalar_lea.vmem %s7, 2
        %v1505 = vld [vmem:[%s1504] sm:$0x1]
        %v1507 = vlaneseq
        %v1508 = vshrl.u32 %v1507, 7
        %v1509 = vsub.s32 0, %v1508
        %v1510 = vrot.slane %v1505, %v1509
        %1512 = vmatprep.subr.mxu0 0.0
        %1513 = vmatpush1.msra.mxu0 0.0
        %1514 = vmatprep.subr.mxu0 0.0
        %1515 = vmatpush1.msra.mxu0 0.0
        %1516 = vmatprep.subr.mxu0 0.0
        %1517 = vmatpush1.msra.mxu0 0.0
        %1518 = vmatprep.subr.mxu0 0.0
        %1519 = vmatpush1.msra.mxu0 0.0
        %1520 = vmatprep.subr.mxu0 0.0
        %1521 = vmatpush1.msra.mxu0 0.0
        %1522 = vmatprep.subr.mxu0 0.0
        %1523 = vmatpush1.msra.mxu0 0.0
        %1524 = vmatprep.subr.mxu0 0.0
        %1525 = vmatpush1.msra.mxu0 0.0
        %1526 = vmatprep.subr.mxu0 0.0
        %1527 = vmatpush1.msra.mxu0 0.0
        %1528 = vmatprep.subr.mxu0 0.0
        %1529 = vmatpush1.msra.mxu0 0.0
        %1530 = vmatprep.subr.mxu0 0.0
        %1531 = vmatpush1.msra.mxu0 0.0
        %1532 = vmatprep.subr.mxu0 0.0
        %1533 = vmatpush1.msra.mxu0 0.0
        %1534 = vmatprep.subr.mxu0 0.0
        %1535 = vmatpush1.msra.mxu0 0.0
        %1536 = vmatprep.subr.mxu0 0.0
        %1537 = vmatpush1.msra.mxu0 %v1503
        %1538 = vmatprep.subr.mxu0 0.0
        %1539 = vmatpush1.msra.mxu0 %v1502
        %1540 = vmatprep.subr.mxu0 0.0
        %1541 = vmatpush1.msra.mxu0 %v1501
        %1542 = vmatprep.subr.mxu0 0.0
        %1543 = vmatpush1.msra.mxu0 %v1500
        %1544 = vmatprep.subr.mxu0 0.0
        %1545 = vmatpush2.msra.mxu0 0.0
        %1546 = vmatprep.subr.mxu0 0.0
        %1547 = vmatpush2.msra.mxu0 0.0
        %1548 = vmatprep.subr.mxu0 0.0
        %1549 = vmatpush2.msra.mxu0 0.0
        %1550 = vmatprep.subr.mxu0 0.0
        %1551 = vmatpush2.msra.mxu0 0.0
        %1552 = vmatprep.subr.mxu0 0.0
        %1553 = vmatpush2.msra.mxu0 0.0
        %1554 = vmatprep.subr.mxu0 0.0
        %1555 = vmatpush2.msra.mxu0 0.0
        %1556 = vmatprep.subr.mxu0 0.0
        %1557 = vmatpush2.msra.mxu0 0.0
        %1558 = vmatprep.subr.mxu0 0.0
        %1559 = vmatpush2.msra.mxu0 0.0
        %1560 = vmatprep.subr.mxu0 0.0
        %1561 = vmatpush2.msra.mxu0 0.0
        %1562 = vmatprep.subr.mxu0 0.0
        %1563 = vmatpush2.msra.mxu0 0.0
        %1564 = vmatprep.subr.mxu0 0.0
        %1565 = vmatpush2.msra.mxu0 0.0
        %1566 = vmatprep.subr.mxu0 0.0
        %1567 = vmatpush2.msra.mxu0 0.0
        %1568 = vmatprep.subr.mxu0 0.0
        %1569 = vmatpush2.msra.mxu0 0.0
        %1570 = vmatprep.subr.mxu0 0.0
        %1571 = vmatpush2.msra.mxu0 0.0
        %1572 = vmatprep.subr.mxu0 0.0
        %1573 = vmatpush2.msra.mxu0 0.0
        %1574 = vmatprep.subr.mxu0 0.0
        %1575 = vmatpush2.msra.mxu0 0.0
        %1576 = vmatprep.mubr.f32.mxu0 0.0
        %1577 = vmatmul.mubr.f32.gmra.mxu0 %v461
        %v1578 = vpop.f32.mrf.mxu0
        %v1579 = vadd.f32 %v1510, %v1578
        %v1580 = vpop.f32.mrf.mxu0
        %1581 = vdwg.mxu0
        %s1582 = scalar_lea.vmem %s8, 64
        %v1583 = vld [vmem:[%s1582] sm:$0xff]
        %v1584 = vld [vmem:[%s1582 + $0x8] sm:$0xff]
        %v1585 = vld [vmem:[%s1582 + $0x10] sm:$0xff]
        %v1586 = vld [vmem:[%s1582 + $0x18] sm:$0xff]
        %s1587 = scalar_lea.vmem %s9, 2
        %v1588 = vld [vmem:[%s1587] sm:$0x1]
        %v1590 = vlaneseq
        %v1591 = vshrl.u32 %v1590, 7
        %v1592 = vsub.s32 0, %v1591
        %v1593 = vrot.slane %v1588, %v1592
        %1595 = vmatprep.subr.mxu0 0.0
        %1596 = vmatpush1.msra.mxu0 0.0
        %1597 = vmatprep.subr.mxu0 0.0
        %1598 = vmatpush1.msra.mxu0 0.0
        %1599 = vmatprep.subr.mxu0 0.0
        %1600 = vmatpush1.msra.mxu0 0.0
        %1601 = vmatprep.subr.mxu0 0.0
        %1602 = vmatpush1.msra.mxu0 0.0
        %1603 = vmatprep.subr.mxu0 0.0
        %1604 = vmatpush1.msra.mxu0 0.0
        %1605 = vmatprep.subr.mxu0 0.0
        %1606 = vmatpush1.msra.mxu0 0.0
        %1607 = vmatprep.subr.mxu0 0.0
        %1608 = vmatpush1.msra.mxu0 0.0
        %1609 = vmatprep.subr.mxu0 0.0
        %1610 = vmatpush1.msra.mxu0 0.0
        %1611 = vmatprep.subr.mxu0 0.0
        %1612 = vmatpush1.msra.mxu0 0.0
        %1613 = vmatprep.subr.mxu0 0.0
        %1614 = vmatpush1.msra.mxu0 0.0
        %1615 = vmatprep.subr.mxu0 0.0
        %1616 = vmatpush1.msra.mxu0 0.0
        %1617 = vmatprep.subr.mxu0 0.0
        %1618 = vmatpush1.msra.mxu0 0.0
        %1619 = vmatprep.subr.mxu0 0.0
        %1620 = vmatpush1.msra.mxu0 %v1586
        %1621 = vmatprep.subr.mxu0 0.0
        %1622 = vmatpush1.msra.mxu0 %v1585
        %1623 = vmatprep.subr.mxu0 0.0
        %1624 = vmatpush1.msra.mxu0 %v1584
        %1625 = vmatprep.subr.mxu0 0.0
        %1626 = vmatpush1.msra.mxu0 %v1583
        %1627 = vmatprep.subr.mxu0 0.0
        %1628 = vmatpush2.msra.mxu0 0.0
        %1629 = vmatprep.subr.mxu0 0.0
        %1630 = vmatpush2.msra.mxu0 0.0
        %1631 = vmatprep.subr.mxu0 0.0
        %1632 = vmatpush2.msra.mxu0 0.0
        %1633 = vmatprep.subr.mxu0 0.0
        %1634 = vmatpush2.msra.mxu0 0.0
        %1635 = vmatprep.subr.mxu0 0.0
        %1636 = vmatpush2.msra.mxu0 0.0
        %1637 = vmatprep.subr.mxu0 0.0
        %1638 = vmatpush2.msra.mxu0 0.0
        %1639 = vmatprep.subr.mxu0 0.0
        %1640 = vmatpush2.msra.mxu0 0.0
        %1641 = vmatprep.subr.mxu0 0.0
        %1642 = vmatpush2.msra.mxu0 0.0
        %1643 = vmatprep.subr.mxu0 0.0
        %1644 = vmatpush2.msra.mxu0 0.0
        %1645 = vmatprep.subr.mxu0 0.0
        %1646 = vmatpush2.msra.mxu0 0.0
        %1647 = vmatprep.subr.mxu0 0.0
        %1648 = vmatpush2.msra.mxu0 0.0
        %1649 = vmatprep.subr.mxu0 0.0
        %1650 = vmatpush2.msra.mxu0 0.0
        %1651 = vmatprep.subr.mxu0 0.0
        %1652 = vmatpush2.msra.mxu0 0.0
        %1653 = vmatprep.subr.mxu0 0.0
        %1654 = vmatpush2.msra.mxu0 0.0
        %1655 = vmatprep.subr.mxu0 0.0
        %1656 = vmatpush2.msra.mxu0 0.0
        %1657 = vmatprep.subr.mxu0 0.0
        %1658 = vmatpush2.msra.mxu0 0.0
        %1659 = vmatprep.mubr.f32.mxu0 0.0
        %1660 = vmatmul.mubr.f32.gmra.mxu0 %v461
        %v1661 = vpop.f32.mrf.mxu0
        %v1662 = vadd.f32 %v1593, %v1661
        %v1663 = vpop.f32.mrf.mxu0
        %1664 = vdwg.mxu0
        %v1665 = vmul.f32 %v1496, 0.35355338
        %v1667 = vsel %vm696, %v1665, 0
        %v1670 = vsel %vm696, %v1579, 0
        %1672 = vmatprep.subr.mxu0 0.0
        %1673 = vmatpush1.xpose.msra.mxu0 0.0
        %1674 = vmatprep.subr.mxu0 0.0
        %1675 = vmatpush1.xpose.msra.mxu0 0.0
        %1676 = vmatprep.subr.mxu0 0.0
        %1677 = vmatpush1.xpose.msra.mxu0 0.0
        %1678 = vmatprep.subr.mxu0 0.0
        %1679 = vmatpush1.xpose.msra.mxu0 0.0
        %1680 = vmatprep.subr.mxu0 0.0
        %1681 = vmatpush1.xpose.msra.mxu0 0.0
        %1682 = vmatprep.subr.mxu0 0.0
        %1683 = vmatpush1.xpose.msra.mxu0 0.0
        %1684 = vmatprep.subr.mxu0 0.0
        %1685 = vmatpush1.xpose.msra.mxu0 0.0
        %1686 = vmatprep.subr.mxu0 0.0
        %1687 = vmatpush1.xpose.msra.mxu0 0.0
        %1688 = vmatprep.subr.mxu0 0.0
        %1689 = vmatpush1.xpose.msra.mxu0 0.0
        %1690 = vmatprep.subr.mxu0 0.0
        %1691 = vmatpush1.xpose.msra.mxu0 0.0
        %1692 = vmatprep.subr.mxu0 0.0
        %1693 = vmatpush1.xpose.msra.mxu0 0.0
        %1694 = vmatprep.subr.mxu0 0.0
        %1695 = vmatpush1.xpose.msra.mxu0 0.0
        %1696 = vmatprep.subr.mxu0 0.0
        %1697 = vmatpush1.xpose.msra.mxu0 0.0
        %1698 = vmatprep.subr.mxu0 0.0
        %1699 = vmatpush1.xpose.msra.mxu0 0.0
        %1700 = vmatprep.subr.mxu0 0.0
        %1701 = vmatpush1.xpose.msra.mxu0 0.0
        %1702 = vmatprep.subr.mxu0 0.0
        %1703 = vmatpush1.xpose.msra.mxu0 %v1670
        %1704 = vmatprep.subr.mxu0 0.0
        %1705 = vmatpush2.xpose.msra.mxu0 0.0
        %1706 = vmatprep.subr.mxu0 0.0
        %1707 = vmatpush2.xpose.msra.mxu0 0.0
        %1708 = vmatprep.subr.mxu0 0.0
        %1709 = vmatpush2.xpose.msra.mxu0 0.0
        %1710 = vmatprep.subr.mxu0 0.0
        %1711 = vmatpush2.xpose.msra.mxu0 0.0
        %1712 = vmatprep.subr.mxu0 0.0
        %1713 = vmatpush2.xpose.msra.mxu0 0.0
        %1714 = vmatprep.subr.mxu0 0.0
        %1715 = vmatpush2.xpose.msra.mxu0 0.0
        %1716 = vmatprep.subr.mxu0 0.0
        %1717 = vmatpush2.xpose.msra.mxu0 0.0
        %1718 = vmatprep.subr.mxu0 0.0
        %1719 = vmatpush2.xpose.msra.mxu0 0.0
        %1720 = vmatprep.subr.mxu0 0.0
        %1721 = vmatpush2.xpose.msra.mxu0 0.0
        %1722 = vmatprep.subr.mxu0 0.0
        %1723 = vmatpush2.xpose.msra.mxu0 0.0
        %1724 = vmatprep.subr.mxu0 0.0
        %1725 = vmatpush2.xpose.msra.mxu0 0.0
        %1726 = vmatprep.subr.mxu0 0.0
        %1727 = vmatpush2.xpose.msra.mxu0 0.0
        %1728 = vmatprep.subr.mxu0 0.0
        %1729 = vmatpush2.xpose.msra.mxu0 0.0
        %1730 = vmatprep.subr.mxu0 0.0
        %1731 = vmatpush2.xpose.msra.mxu0 0.0
        %1732 = vmatprep.subr.mxu0 0.0
        %1733 = vmatpush2.xpose.msra.mxu0 0.0
        %1734 = vmatprep.subr.mxu0 0.0
        %1735 = vmatpush2.xpose.msra.mxu0 0.0
        %1736 = vmatprep.mubr.f32.mxu0 0.0
        %1737 = vmatmul.mubr.f32.gmra.mxu0 %v1667
        %v1738 = vpop.f32.mrf.mxu0
        %v1739 = vadd.f32 0.0, %v1738
        %v1740 = vpop.f32.mrf.mxu0
        %1741 = vdwg.mxu0
        %v1742 = vsel %vm696, %v1739, -inf
        %1743 = vmax.xlane.f32.xlu0 %v1742
        %v1744 = vpop.xlane.xlu0 %1743
        %v1745 = vsub.f32 %v1739, %v1744
        %v1746 = vmul.f32 %v1745, 1.442695
        %v1747 = vpow.pop %v1746
        %v1748 = vsel %vm696, %v1747, 0.0
        %1749 = vadd.xlane.f32.xlu0 %v1748
        %v1750 = vpop.xlane.xlu0 %1749
        %v1751 = vrcp.pop %v1750
        %v1752 = vmul.f32 %v1747, %v1751
        %v1754 = vsel %vm696, %v1752, 0
        %1756 = vmatprep.subr.mxu0 0.0
        %1757 = vmatpush1.msra.mxu0 0.0
        %1758 = vmatprep.subr.mxu0 0.0
        %1759 = vmatpush1.msra.mxu0 0.0
        %1760 = vmatprep.subr.mxu0 0.0
        %1761 = vmatpush1.msra.mxu0 0.0
        %1762 = vmatprep.subr.mxu0 0.0
        %1763 = vmatpush1.msra.mxu0 0.0
        %1764 = vmatprep.subr.mxu0 0.0
        %1765 = vmatpush1.msra.mxu0 0.0
        %1766 = vmatprep.subr.mxu0 0.0
        %1767 = vmatpush1.msra.mxu0 0.0
        %1768 = vmatprep.subr.mxu0 0.0
        %1769 = vmatpush1.msra.mxu0 0.0
        %1770 = vmatprep.subr.mxu0 0.0
        %1771 = vmatpush1.msra.mxu0 0.0
        %1772 = vmatprep.subr.mxu0 0.0
        %1773 = vmatpush1.msra.mxu0 0.0
        %1774 = vmatprep.subr.mxu0 0.0
        %1775 = vmatpush1.msra.mxu0 0.0
        %1776 = vmatprep.subr.mxu0 0.0
        %1777 = vmatpush1.msra.mxu0 0.0
        %1778 = vmatprep.subr.mxu0 0.0
        %1779 = vmatpush1.msra.mxu0 0.0
        %1780 = vmatprep.subr.mxu0 0.0
        %1781 = vmatpush1.msra.mxu0 0.0
        %1782 = vmatprep.subr.mxu0 0.0
        %1783 = vmatpush1.msra.mxu0 0.0
        %1784 = vmatprep.subr.mxu0 0.0
        %1785 = vmatpush1.msra.mxu0 0.0
        %1786 = vmatprep.subr.mxu0 0.0
        %1787 = vmatpush1.msra.mxu0 %v1662
        %1788 = vmatprep.subr.mxu0 0.0
        %1789 = vmatpush2.msra.mxu0 0.0
        %1790 = vmatprep.subr.mxu0 0.0
        %1791 = vmatpush2.msra.mxu0 0.0
        %1792 = vmatprep.subr.mxu0 0.0
        %1793 = vmatpush2.msra.mxu0 0.0
        %1794 = vmatprep.subr.mxu0 0.0
        %1795 = vmatpush2.msra.mxu0 0.0
        %1796 = vmatprep.subr.mxu0 0.0
        %1797 = vmatpush2.msra.mxu0 0.0
        %1798 = vmatprep.subr.mxu0 0.0
        %1799 = vmatpush2.msra.mxu0 0.0
        %1800 = vmatprep.subr.mxu0 0.0
        %1801 = vmatpush2.msra.mxu0 0.0
        %1802 = vmatprep.subr.mxu0 0.0
        %1803 = vmatpush2.msra.mxu0 0.0
        %1804 = vmatprep.subr.mxu0 0.0
        %1805 = vmatpush2.msra.mxu0 0.0
        %1806 = vmatprep.subr.mxu0 0.0
        %1807 = vmatpush2.msra.mxu0 0.0
        %1808 = vmatprep.subr.mxu0 0.0
        %1809 = vmatpush2.msra.mxu0 0.0
        %1810 = vmatprep.subr.mxu0 0.0
        %1811 = vmatpush2.msra.mxu0 0.0
        %1812 = vmatprep.subr.mxu0 0.0
        %1813 = vmatpush2.msra.mxu0 0.0
        %1814 = vmatprep.subr.mxu0 0.0
        %1815 = vmatpush2.msra.mxu0 0.0
        %1816 = vmatprep.subr.mxu0 0.0
        %1817 = vmatpush2.msra.mxu0 0.0
        %1818 = vmatprep.subr.mxu0 0.0
        %1819 = vmatpush2.msra.mxu0 0.0
        %1820 = vmatprep.mubr.f32.mxu0 0.0
        %1821 = vmatmul.mubr.f32.gmra.mxu0 %v1754
        %v1822 = vpop.f32.mrf.mxu0
        %v1823 = vadd.f32 0.0, %v1822
        %v1824 = vpop.f32.mrf.mxu0
        %1825 = vdwg.mxu0
        %s1826 = scalar_lea.vmem %s10, 16
        %v1827 = vld [vmem:[%s1826] sm:$0xff]
        %v1829 = vsel %vm696, %v1823, 0
        %1831 = vmatprep.subr.mxu0 0.0
        %1832 = vmatpush1.msra.mxu0 0.0
        %1833 = vmatprep.subr.mxu0 0.0
        %1834 = vmatpush1.msra.mxu0 0.0
        %1835 = vmatprep.subr.mxu0 0.0
        %1836 = vmatpush1.msra.mxu0 0.0
        %1837 = vmatprep.subr.mxu0 0.0
        %1838 = vmatpush1.msra.mxu0 0.0
        %1839 = vmatprep.subr.mxu0 0.0
        %1840 = vmatpush1.msra.mxu0 0.0
        %1841 = vmatprep.subr.mxu0 0.0
        %1842 = vmatpush1.msra.mxu0 0.0
        %1843 = vmatprep.subr.mxu0 0.0
        %1844 = vmatpush1.msra.mxu0 0.0
        %1845 = vmatprep.subr.mxu0 0.0
        %1846 = vmatpush1.msra.mxu0 0.0
        %1847 = vmatprep.subr.mxu0 0.0
        %1848 = vmatpush1.msra.mxu0 0.0
        %1849 = vmatprep.subr.mxu0 0.0
        %1850 = vmatpush1.msra.mxu0 0.0
        %1851 = vmatprep.subr.mxu0 0.0
        %1852 = vmatpush1.msra.mxu0 0.0
        %1853 = vmatprep.subr.mxu0 0.0
        %1854 = vmatpush1.msra.mxu0 0.0
        %1855 = vmatprep.subr.mxu0 0.0
        %1856 = vmatpush1.msra.mxu0 0.0
        %1857 = vmatprep.subr.mxu0 0.0
        %1858 = vmatpush1.msra.mxu0 0.0
        %1859 = vmatprep.subr.mxu0 0.0
        %1860 = vmatpush1.msra.mxu0 0.0
        %1861 = vmatprep.subr.mxu0 0.0
        %1862 = vmatpush1.msra.mxu0 %v1827
        %1863 = vmatprep.subr.mxu0 0.0
        %1864 = vmatpush2.msra.mxu0 0.0
        %1865 = vmatprep.subr.mxu0 0.0
        %1866 = vmatpush2.msra.mxu0 0.0
        %1867 = vmatprep.subr.mxu0 0.0
        %1868 = vmatpush2.msra.mxu0 0.0
        %1869 = vmatprep.subr.mxu0 0.0
        %1870 = vmatpush2.msra.mxu0 0.0
        %1871 = vmatprep.subr.mxu0 0.0
        %1872 = vmatpush2.msra.mxu0 0.0
        %1873 = vmatprep.subr.mxu0 0.0
        %1874 = vmatpush2.msra.mxu0 0.0
        %1875 = vmatprep.subr.mxu0 0.0
        %1876 = vmatpush2.msra.mxu0 0.0
        %1877 = vmatprep.subr.mxu0 0.0
        %1878 = vmatpush2.msra.mxu0 0.0
        %1879 = vmatprep.subr.mxu0 0.0
        %1880 = vmatpush2.msra.mxu0 0.0
        %1881 = vmatprep.subr.mxu0 0.0
        %1882 = vmatpush2.msra.mxu0 0.0
        %1883 = vmatprep.subr.mxu0 0.0
        %1884 = vmatpush2.msra.mxu0 0.0
        %1885 = vmatprep.subr.mxu0 0.0
        %1886 = vmatpush2.msra.mxu0 0.0
        %1887 = vmatprep.subr.mxu0 0.0
        %1888 = vmatpush2.msra.mxu0 0.0
        %1889 = vmatprep.subr.mxu0 0.0
        %1890 = vmatpush2.msra.mxu0 0.0
        %1891 = vmatprep.subr.mxu0 0.0
        %1892 = vmatpush2.msra.mxu0 0.0
        %1893 = vmatprep.subr.mxu0 0.0
        %1894 = vmatpush2.msra.mxu0 0.0
        %1895 = vmatprep.mubr.f32.mxu0 0.0
        %1896 = vmatmul.mubr.f32.gmra.mxu0 %v1829
        %v1897 = vpop.f32.mrf.mxu0
        %v1898 = vadd.f32 0.0, %v1897
        %v1899 = vpop.f32.mrf.mxu0
        %1900 = vdwg.mxu0
        %v1901 = vadd.f32 %v1413, %v1898
        %s1902 = scalar_lea.vmem %s4, 96
        %v1903 = vld [vmem:[%s1902] sm:$0xff]
        %v1904 = vld [vmem:[%s1902 + $0x8] sm:$0xff]
        %v1905 = vld [vmem:[%s1902 + $0x10] sm:$0xff]
        %v1906 = vld [vmem:[%s1902 + $0x18] sm:$0xff]
        %s1907 = scalar_lea.vmem %s5, 3
        %v1908 = vld [vmem:[%s1907] sm:$0x1]
        %v1910 = vlaneseq
        %v1911 = vshrl.u32 %v1910, 7
        %v1912 = vsub.s32 0, %v1911
        %v1913 = vrot.slane %v1908, %v1912
        %1915 = vmatprep.subr.mxu0 0.0
        %1916 = vmatpush1.msra.mxu0 0.0
        %1917 = vmatprep.subr.mxu0 0.0
        %1918 = vmatpush1.msra.mxu0 0.0
        %1919 = vmatprep.subr.mxu0 0.0
        %1920 = vmatpush1.msra.mxu0 0.0
        %1921 = vmatprep.subr.mxu0 0.0
        %1922 = vmatpush1.msra.mxu0 0.0
        %1923 = vmatprep.subr.mxu0 0.0
        %1924 = vmatpush1.msra.mxu0 0.0
        %1925 = vmatprep.subr.mxu0 0.0
        %1926 = vmatpush1.msra.mxu0 0.0
        %1927 = vmatprep.subr.mxu0 0.0
        %1928 = vmatpush1.msra.mxu0 0.0
        %1929 = vmatprep.subr.mxu0 0.0
        %1930 = vmatpush1.msra.mxu0 0.0
        %1931 = vmatprep.subr.mxu0 0.0
        %1932 = vmatpush1.msra.mxu0 0.0
        %1933 = vmatprep.subr.mxu0 0.0
        %1934 = vmatpush1.msra.mxu0 0.0
        %1935 = vmatprep.subr.mxu0 0.0
        %1936 = vmatpush1.msra.mxu0 0.0
        %1937 = vmatprep.subr.mxu0 0.0
        %1938 = vmatpush1.msra.mxu0 0.0
        %1939 = vmatprep.subr.mxu0 0.0
        %1940 = vmatpush1.msra.mxu0 %v1906
        %1941 = vmatprep.subr.mxu0 0.0
        %1942 = vmatpush1.msra.mxu0 %v1905
        %1943 = vmatprep.subr.mxu0 0.0
        %1944 = vmatpush1.msra.mxu0 %v1904
        %1945 = vmatprep.subr.mxu0 0.0
        %1946 = vmatpush1.msra.mxu0 %v1903
        %1947 = vmatprep.subr.mxu0 0.0
        %1948 = vmatpush2.msra.mxu0 0.0
        %1949 = vmatprep.subr.mxu0 0.0
        %1950 = vmatpush2.msra.mxu0 0.0
        %1951 = vmatprep.subr.mxu0 0.0
        %1952 = vmatpush2.msra.mxu0 0.0
        %1953 = vmatprep.subr.mxu0 0.0
        %1954 = vmatpush2.msra.mxu0 0.0
        %1955 = vmatprep.subr.mxu0 0.0
        %1956 = vmatpush2.msra.mxu0 0.0
        %1957 = vmatprep.subr.mxu0 0.0
        %1958 = vmatpush2.msra.mxu0 0.0
        %1959 = vmatprep.subr.mxu0 0.0
        %1960 = vmatpush2.msra.mxu0 0.0
        %1961 = vmatprep.subr.mxu0 0.0
        %1962 = vmatpush2.msra.mxu0 0.0
        %1963 = vmatprep.subr.mxu0 0.0
        %1964 = vmatpush2.msra.mxu0 0.0
        %1965 = vmatprep.subr.mxu0 0.0
        %1966 = vmatpush2.msra.mxu0 0.0
        %1967 = vmatprep.subr.mxu0 0.0
        %1968 = vmatpush2.msra.mxu0 0.0
        %1969 = vmatprep.subr.mxu0 0.0
        %1970 = vmatpush2.msra.mxu0 0.0
        %1971 = vmatprep.subr.mxu0 0.0
        %1972 = vmatpush2.msra.mxu0 0.0
        %1973 = vmatprep.subr.mxu0 0.0
        %1974 = vmatpush2.msra.mxu0 0.0
        %1975 = vmatprep.subr.mxu0 0.0
        %1976 = vmatpush2.msra.mxu0 0.0
        %1977 = vmatprep.subr.mxu0 0.0
        %1978 = vmatpush2.msra.mxu0 0.0
        %1979 = vmatprep.mubr.f32.mxu0 0.0
        %1980 = vmatmul.mubr.f32.gmra.mxu0 %v461
        %v1981 = vpop.f32.mrf.mxu0
        %v1982 = vadd.f32 %v1913, %v1981
        %v1983 = vpop.f32.mrf.mxu0
        %1984 = vdwg.mxu0
        %s1985 = scalar_lea.vmem %s6, 96
        %v1986 = vld [vmem:[%s1985] sm:$0xff]
        %v1987 = vld [vmem:[%s1985 + $0x8] sm:$0xff]
        %v1988 = vld [vmem:[%s1985 + $0x10] sm:$0xff]
        %v1989 = vld [vmem:[%s1985 + $0x18] sm:$0xff]
        %s1990 = scalar_lea.vmem %s7, 3
        %v1991 = vld [vmem:[%s1990] sm:$0x1]
        %v1993 = vlaneseq
        %v1994 = vshrl.u32 %v1993, 7
        %v1995 = vsub.s32 0, %v1994
        %v1996 = vrot.slane %v1991, %v1995
        %1998 = vmatprep.subr.mxu0 0.0
        %1999 = vmatpush1.msra.mxu0 0.0
        %2000 = vmatprep.subr.mxu0 0.0
        %2001 = vmatpush1.msra.mxu0 0.0
        %2002 = vmatprep.subr.mxu0 0.0
        %2003 = vmatpush1.msra.mxu0 0.0
        %2004 = vmatprep.subr.mxu0 0.0
        %2005 = vmatpush1.msra.mxu0 0.0
        %2006 = vmatprep.subr.mxu0 0.0
        %2007 = vmatpush1.msra.mxu0 0.0
        %2008 = vmatprep.subr.mxu0 0.0
        %2009 = vmatpush1.msra.mxu0 0.0
        %2010 = vmatprep.subr.mxu0 0.0
        %2011 = vmatpush1.msra.mxu0 0.0
        %2012 = vmatprep.subr.mxu0 0.0
        %2013 = vmatpush1.msra.mxu0 0.0
        %2014 = vmatprep.subr.mxu0 0.0
        %2015 = vmatpush1.msra.mxu0 0.0
        %2016 = vmatprep.subr.mxu0 0.0
        %2017 = vmatpush1.msra.mxu0 0.0
        %2018 = vmatprep.subr.mxu0 0.0
        %2019 = vmatpush1.msra.mxu0 0.0
        %2020 = vmatprep.subr.mxu0 0.0
        %2021 = vmatpush1.msra.mxu0 0.0
        %2022 = vmatprep.subr.mxu0 0.0
        %2023 = vmatpush1.msra.mxu0 %v1989
        %2024 = vmatprep.subr.mxu0 0.0
        %2025 = vmatpush1.msra.mxu0 %v1988
        %2026 = vmatprep.subr.mxu0 0.0
        %2027 = vmatpush1.msra.mxu0 %v1987
        %2028 = vmatprep.subr.mxu0 0.0
        %2029 = vmatpush1.msra.mxu0 %v1986
        %2030 = vmatprep.subr.mxu0 0.0
        %2031 = vmatpush2.msra.mxu0 0.0
        %2032 = vmatprep.subr.mxu0 0.0
        %2033 = vmatpush2.msra.mxu0 0.0
        %2034 = vmatprep.subr.mxu0 0.0
        %2035 = vmatpush2.msra.mxu0 0.0
        %2036 = vmatprep.subr.mxu0 0.0
        %2037 = vmatpush2.msra.mxu0 0.0
        %2038 = vmatprep.subr.mxu0 0.0
        %2039 = vmatpush2.msra.mxu0 0.0
        %2040 = vmatprep.subr.mxu0 0.0
        %2041 = vmatpush2.msra.mxu0 0.0
        %2042 = vmatprep.subr.mxu0 0.0
        %2043 = vmatpush2.msra.mxu0 0.0
        %2044 = vmatprep.subr.mxu0 0.0
        %2045 = vmatpush2.msra.mxu0 0.0
        %2046 = vmatprep.subr.mxu0 0.0
        %2047 = vmatpush2.msra.mxu0 0.0
        %2048 = vmatprep.subr.mxu0 0.0
        %2049 = vmatpush2.msra.mxu0 0.0
        %2050 = vmatprep.subr.mxu0 0.0
        %2051 = vmatpush2.msra.mxu0 0.0
        %2052 = vmatprep.subr.mxu0 0.0
        %2053 = vmatpush2.msra.mxu0 0.0
        %2054 = vmatprep.subr.mxu0 0.0
        %2055 = vmatpush2.msra.mxu0 0.0
        %2056 = vmatprep.subr.mxu0 0.0
        %2057 = vmatpush2.msra.mxu0 0.0
        %2058 = vmatprep.subr.mxu0 0.0
        %2059 = vmatpush2.msra.mxu0 0.0
        %2060 = vmatprep.subr.mxu0 0.0
        %2061 = vmatpush2.msra.mxu0 0.0
        %2062 = vmatprep.mubr.f32.mxu0 0.0
        %2063 = vmatmul.mubr.f32.gmra.mxu0 %v461
        %v2064 = vpop.f32.mrf.mxu0
        %v2065 = vadd.f32 %v1996, %v2064
        %v2066 = vpop.f32.mrf.mxu0
        %2067 = vdwg.mxu0
        %s2068 = scalar_lea.vmem %s8, 96
        %v2069 = vld [vmem:[%s2068] sm:$0xff]
        %v2070 = vld [vmem:[%s2068 + $0x8] sm:$0xff]
        %v2071 = vld [vmem:[%s2068 + $0x10] sm:$0xff]
        %v2072 = vld [vmem:[%s2068 + $0x18] sm:$0xff]
        %s2073 = scalar_lea.vmem %s9, 3
        %v2074 = vld [vmem:[%s2073] sm:$0x1]
        %v2076 = vlaneseq
        %v2077 = vshrl.u32 %v2076, 7
        %v2078 = vsub.s32 0, %v2077
        %v2079 = vrot.slane %v2074, %v2078
        %2081 = vmatprep.subr.mxu0 0.0
        %2082 = vmatpush1.msra.mxu0 0.0
        %2083 = vmatprep.subr.mxu0 0.0
        %2084 = vmatpush1.msra.mxu0 0.0
        %2085 = vmatprep.subr.mxu0 0.0
        %2086 = vmatpush1.msra.mxu0 0.0
        %2087 = vmatprep.subr.mxu0 0.0
        %2088 = vmatpush1.msra.mxu0 0.0
        %2089 = vmatprep.subr.mxu0 0.0
        %2090 = vmatpush1.msra.mxu0 0.0
        %2091 = vmatprep.subr.mxu0 0.0
        %2092 = vmatpush1.msra.mxu0 0.0
        %2093 = vmatprep.subr.mxu0 0.0
        %2094 = vmatpush1.msra.mxu0 0.0
        %2095 = vmatprep.subr.mxu0 0.0
        %2096 = vmatpush1.msra.mxu0 0.0
        %2097 = vmatprep.subr.mxu0 0.0
        %2098 = vmatpush1.msra.mxu0 0.0
        %2099 = vmatprep.subr.mxu0 0.0
        %2100 = vmatpush1.msra.mxu0 0.0
        %2101 = vmatprep.subr.mxu0 0.0
        %2102 = vmatpush1.msra.mxu0 0.0
        %2103 = vmatprep.subr.mxu0 0.0
        %2104 = vmatpush1.msra.mxu0 0.0
        %2105 = vmatprep.subr.mxu0 0.0
        %2106 = vmatpush1.msra.mxu0 %v2072
        %2107 = vmatprep.subr.mxu0 0.0
        %2108 = vmatpush1.msra.mxu0 %v2071
        %2109 = vmatprep.subr.mxu0 0.0
        %2110 = vmatpush1.msra.mxu0 %v2070
        %2111 = vmatprep.subr.mxu0 0.0
        %2112 = vmatpush1.msra.mxu0 %v2069
        %2113 = vmatprep.subr.mxu0 0.0
        %2114 = vmatpush2.msra.mxu0 0.0
        %2115 = vmatprep.subr.mxu0 0.0
        %2116 = vmatpush2.msra.mxu0 0.0
        %2117 = vmatprep.subr.mxu0 0.0
        %2118 = vmatpush2.msra.mxu0 0.0
        %2119 = vmatprep.subr.mxu0 0.0
        %2120 = vmatpush2.msra.mxu0 0.0
        %2121 = vmatprep.subr.mxu0 0.0
        %2122 = vmatpush2.msra.mxu0 0.0
        %2123 = vmatprep.subr.mxu0 0.0
        %2124 = vmatpush2.msra.mxu0 0.0
        %2125 = vmatprep.subr.mxu0 0.0
        %2126 = vmatpush2.msra.mxu0 0.0
        %2127 = vmatprep.subr.mxu0 0.0
        %2128 = vmatpush2.msra.mxu0 0.0
        %2129 = vmatprep.subr.mxu0 0.0
        %2130 = vmatpush2.msra.mxu0 0.0
        %2131 = vmatprep.subr.mxu0 0.0
        %2132 = vmatpush2.msra.mxu0 0.0
        %2133 = vmatprep.subr.mxu0 0.0
        %2134 = vmatpush2.msra.mxu0 0.0
        %2135 = vmatprep.subr.mxu0 0.0
        %2136 = vmatpush2.msra.mxu0 0.0
        %2137 = vmatprep.subr.mxu0 0.0
        %2138 = vmatpush2.msra.mxu0 0.0
        %2139 = vmatprep.subr.mxu0 0.0
        %2140 = vmatpush2.msra.mxu0 0.0
        %2141 = vmatprep.subr.mxu0 0.0
        %2142 = vmatpush2.msra.mxu0 0.0
        %2143 = vmatprep.subr.mxu0 0.0
        %2144 = vmatpush2.msra.mxu0 0.0
        %2145 = vmatprep.mubr.f32.mxu0 0.0
        %2146 = vmatmul.mubr.f32.gmra.mxu0 %v461
        %v2147 = vpop.f32.mrf.mxu0
        %v2148 = vadd.f32 %v2079, %v2147
        %v2149 = vpop.f32.mrf.mxu0
        %2150 = vdwg.mxu0
        %v2151 = vmul.f32 %v1982, 0.35355338
        %v2153 = vsel %vm696, %v2151, 0
        %v2156 = vsel %vm696, %v2065, 0
        %2158 = vmatprep.subr.mxu0 0.0
        %2159 = vmatpush1.xpose.msra.mxu0 0.0
        %2160 = vmatprep.subr.mxu0 0.0
        %2161 = vmatpush1.xpose.msra.mxu0 0.0
        %2162 = vmatprep.subr.mxu0 0.0
        %2163 = vmatpush1.xpose.msra.mxu0 0.0
        %2164 = vmatprep.subr.mxu0 0.0
        %2165 = vmatpush1.xpose.msra.mxu0 0.0
        %2166 = vmatprep.subr.mxu0 0.0
        %2167 = vmatpush1.xpose.msra.mxu0 0.0
        %2168 = vmatprep.subr.mxu0 0.0
        %2169 = vmatpush1.xpose.msra.mxu0 0.0
        %2170 = vmatprep.subr.mxu0 0.0
        %2171 = vmatpush1.xpose.msra.mxu0 0.0
        %2172 = vmatprep.subr.mxu0 0.0
        %2173 = vmatpush1.xpose.msra.mxu0 0.0
        %2174 = vmatprep.subr.mxu0 0.0
        %2175 = vmatpush1.xpose.msra.mxu0 0.0
        %2176 = vmatprep.subr.mxu0 0.0
        %2177 = vmatpush1.xpose.msra.mxu0 0.0
        %2178 = vmatprep.subr.mxu0 0.0
        %2179 = vmatpush1.xpose.msra.mxu0 0.0
        %2180 = vmatprep.subr.mxu0 0.0
        %2181 = vmatpush1.xpose.msra.mxu0 0.0
        %2182 = vmatprep.subr.mxu0 0.0
        %2183 = vmatpush1.xpose.msra.mxu0 0.0
        %2184 = vmatprep.subr.mxu0 0.0
        %2185 = vmatpush1.xpose.msra.mxu0 0.0
        %2186 = vmatprep.subr.mxu0 0.0
        %2187 = vmatpush1.xpose.msra.mxu0 0.0
        %2188 = vmatprep.subr.mxu0 0.0
        %2189 = vmatpush1.xpose.msra.mxu0 %v2156
        %2190 = vmatprep.subr.mxu0 0.0
        %2191 = vmatpush2.xpose.msra.mxu0 0.0
        %2192 = vmatprep.subr.mxu0 0.0
        %2193 = vmatpush2.xpose.msra.mxu0 0.0
        %2194 = vmatprep.subr.mxu0 0.0
        %2195 = vmatpush2.xpose.msra.mxu0 0.0
        %2196 = vmatprep.subr.mxu0 0.0
        %2197 = vmatpush2.xpose.msra.mxu0 0.0
        %2198 = vmatprep.subr.mxu0 0.0
        %2199 = vmatpush2.xpose.msra.mxu0 0.0
        %2200 = vmatprep.subr.mxu0 0.0
        %2201 = vmatpush2.xpose.msra.mxu0 0.0
        %2202 = vmatprep.subr.mxu0 0.0
        %2203 = vmatpush2.xpose.msra.mxu0 0.0
        %2204 = vmatprep.subr.mxu0 0.0
        %2205 = vmatpush2.xpose.msra.mxu0 0.0
        %2206 = vmatprep.subr.mxu0 0.0
        %2207 = vmatpush2.xpose.msra.mxu0 0.0
        %2208 = vmatprep.subr.mxu0 0.0
        %2209 = vmatpush2.xpose.msra.mxu0 0.0
        %2210 = vmatprep.subr.mxu0 0.0
        %2211 = vmatpush2.xpose.msra.mxu0 0.0
        %2212 = vmatprep.subr.mxu0 0.0
        %2213 = vmatpush2.xpose.msra.mxu0 0.0
        %2214 = vmatprep.subr.mxu0 0.0
        %2215 = vmatpush2.xpose.msra.mxu0 0.0
        %2216 = vmatprep.subr.mxu0 0.0
        %2217 = vmatpush2.xpose.msra.mxu0 0.0
        %2218 = vmatprep.subr.mxu0 0.0
        %2219 = vmatpush2.xpose.msra.mxu0 0.0
        %2220 = vmatprep.subr.mxu0 0.0
        %2221 = vmatpush2.xpose.msra.mxu0 0.0
        %2222 = vmatprep.mubr.f32.mxu0 0.0
        %2223 = vmatmul.mubr.f32.gmra.mxu0 %v2153
        %v2224 = vpop.f32.mrf.mxu0
        %v2225 = vadd.f32 0.0, %v2224
        %v2226 = vpop.f32.mrf.mxu0
        %2227 = vdwg.mxu0
        %v2228 = vsel %vm696, %v2225, -inf
        %2229 = vmax.xlane.f32.xlu0 %v2228
        %v2230 = vpop.xlane.xlu0 %2229
        %v2231 = vsub.f32 %v2225, %v2230
        %v2232 = vmul.f32 %v2231, 1.442695
        %v2233 = vpow.pop %v2232
        %v2234 = vsel %vm696, %v2233, 0.0
        %2235 = vadd.xlane.f32.xlu0 %v2234
        %v2236 = vpop.xlane.xlu0 %2235
        %v2237 = vrcp.pop %v2236
        %v2238 = vmul.f32 %v2233, %v2237
        %v2240 = vsel %vm696, %v2238, 0
        %2242 = vmatprep.subr.mxu0 0.0
        %2243 = vmatpush1.msra.mxu0 0.0
        %2244 = vmatprep.subr.mxu0 0.0
        %2245 = vmatpush1.msra.mxu0 0.0
        %2246 = vmatprep.subr.mxu0 0.0
        %2247 = vmatpush1.msra.mxu0 0.0
        %2248 = vmatprep.subr.mxu0 0.0
        %2249 = vmatpush1.msra.mxu0 0.0
        %2250 = vmatprep.subr.mxu0 0.0
        %2251 = vmatpush1.msra.mxu0 0.0
        %2252 = vmatprep.subr.mxu0 0.0
        %2253 = vmatpush1.msra.mxu0 0.0
        %2254 = vmatprep.subr.mxu0 0.0
        %2255 = vmatpush1.msra.mxu0 0.0
        %2256 = vmatprep.subr.mxu0 0.0
        %2257 = vmatpush1.msra.mxu0 0.0
        %2258 = vmatprep.subr.mxu0 0.0
        %2259 = vmatpush1.msra.mxu0 0.0
        %2260 = vmatprep.subr.mxu0 0.0
        %2261 = vmatpush1.msra.mxu0 0.0
        %2262 = vmatprep.subr.mxu0 0.0
        %2263 = vmatpush1.msra.mxu0 0.0
        %2264 = vmatprep.subr.mxu0 0.0
        %2265 = vmatpush1.msra.mxu0 0.0
        %2266 = vmatprep.subr.mxu0 0.0
        %2267 = vmatpush1.msra.mxu0 0.0
        %2268 = vmatprep.subr.mxu0 0.0
        %2269 = vmatpush1.msra.mxu0 0.0
        %2270 = vmatprep.subr.mxu0 0.0
        %2271 = vmatpush1.msra.mxu0 0.0
        %2272 = vmatprep.subr.mxu0 0.0
        %2273 = vmatpush1.msra.mxu0 %v2148
        %2274 = vmatprep.subr.mxu0 0.0
        %2275 = vmatpush2.msra.mxu0 0.0
        %2276 = vmatprep.subr.mxu0 0.0
        %2277 = vmatpush2.msra.mxu0 0.0
        %2278 = vmatprep.subr.mxu0 0.0
        %2279 = vmatpush2.msra.mxu0 0.0
        %2280 = vmatprep.subr.mxu0 0.0
        %2281 = vmatpush2.msra.mxu0 0.0
        %2282 = vmatprep.subr.mxu0 0.0
        %2283 = vmatpush2.msra.mxu0 0.0
        %2284 = vmatprep.subr.mxu0 0.0
        %2285 = vmatpush2.msra.mxu0 0.0
        %2286 = vmatprep.subr.mxu0 0.0
        %2287 = vmatpush2.msra.mxu0 0.0
        %2288 = vmatprep.subr.mxu0 0.0
        %2289 = vmatpush2.msra.mxu0 0.0
        %2290 = vmatprep.subr.mxu0 0.0
        %2291 = vmatpush2.msra.mxu0 0.0
        %2292 = vmatprep.subr.mxu0 0.0
        %2293 = vmatpush2.msra.mxu0 0.0
        %2294 = vmatprep.subr.mxu0 0.0
        %2295 = vmatpush2.msra.mxu0 0.0
        %2296 = vmatprep.subr.mxu0 0.0
        %2297 = vmatpush2.msra.mxu0 0.0
        %2298 = vmatprep.subr.mxu0 0.0
        %2299 = vmatpush2.msra.mxu0 0.0
        %2300 = vmatprep.subr.mxu0 0.0
        %2301 = vmatpush2.msra.mxu0 0.0
        %2302 = vmatprep.subr.mxu0 0.0
        %2303 = vmatpush2.msra.mxu0 0.0
        %2304 = vmatprep.subr.mxu0 0.0
        %2305 = vmatpush2.msra.mxu0 0.0
        %2306 = vmatprep.mubr.f32.mxu0 0.0
        %2307 = vmatmul.mubr.f32.gmra.mxu0 %v2240
        %v2308 = vpop.f32.mrf.mxu0
        %v2309 = vadd.f32 0.0, %v2308
        %v2310 = vpop.f32.mrf.mxu0
        %2311 = vdwg.mxu0
        %s2312 = scalar_lea.vmem %s10, 24
        %v2313 = vld [vmem:[%s2312] sm:$0xff]
        %v2315 = vsel %vm696, %v2309, 0
        %2317 = vmatprep.subr.mxu0 0.0
        %2318 = vmatpush1.msra.mxu0 0.0
        %2319 = vmatprep.subr.mxu0 0.0
        %2320 = vmatpush1.msra.mxu0 0.0
        %2321 = vmatprep.subr.mxu0 0.0
        %2322 = vmatpush1.msra.mxu0 0.0
        %2323 = vmatprep.subr.mxu0 0.0
        %2324 = vmatpush1.msra.mxu0 0.0
        %2325 = vmatprep.subr.mxu0 0.0
        %2326 = vmatpush1.msra.mxu0 0.0
        %2327 = vmatprep.subr.mxu0 0.0
        %2328 = vmatpush1.msra.mxu0 0.0
        %2329 = vmatprep.subr.mxu0 0.0
        %2330 = vmatpush1.msra.mxu0 0.0
        %2331 = vmatprep.subr.mxu0 0.0
        %2332 = vmatpush1.msra.mxu0 0.0
        %2333 = vmatprep.subr.mxu0 0.0
        %2334 = vmatpush1.msra.mxu0 0.0
        %2335 = vmatprep.subr.mxu0 0.0
        %2336 = vmatpush1.msra.mxu0 0.0
        %2337 = vmatprep.subr.mxu0 0.0
        %2338 = vmatpush1.msra.mxu0 0.0
        %2339 = vmatprep.subr.mxu0 0.0
        %2340 = vmatpush1.msra.mxu0 0.0
        %2341 = vmatprep.subr.mxu0 0.0
        %2342 = vmatpush1.msra.mxu0 0.0
        %2343 = vmatprep.subr.mxu0 0.0
        %2344 = vmatpush1.msra.mxu0 0.0
        %2345 = vmatprep.subr.mxu0 0.0
        %2346 = vmatpush1.msra.mxu0 0.0
        %2347 = vmatprep.subr.mxu0 0.0
        %2348 = vmatpush1.msra.mxu0 %v2313
        %2349 = vmatprep.subr.mxu0 0.0
        %2350 = vmatpush2.msra.mxu0 0.0
        %2351 = vmatprep.subr.mxu0 0.0
        %2352 = vmatpush2.msra.mxu0 0.0
        %2353 = vmatprep.subr.mxu0 0.0
        %2354 = vmatpush2.msra.mxu0 0.0
        %2355 = vmatprep.subr.mxu0 0.0
        %2356 = vmatpush2.msra.mxu0 0.0
        %2357 = vmatprep.subr.mxu0 0.0
        %2358 = vmatpush2.msra.mxu0 0.0
        %2359 = vmatprep.subr.mxu0 0.0
        %2360 = vmatpush2.msra.mxu0 0.0
        %2361 = vmatprep.subr.mxu0 0.0
        %2362 = vmatpush2.msra.mxu0 0.0
        %2363 = vmatprep.subr.mxu0 0.0
        %2364 = vmatpush2.msra.mxu0 0.0
        %2365 = vmatprep.subr.mxu0 0.0
        %2366 = vmatpush2.msra.mxu0 0.0
        %2367 = vmatprep.subr.mxu0 0.0
        %2368 = vmatpush2.msra.mxu0 0.0
        %2369 = vmatprep.subr.mxu0 0.0
        %2370 = vmatpush2.msra.mxu0 0.0
        %2371 = vmatprep.subr.mxu0 0.0
        %2372 = vmatpush2.msra.mxu0 0.0
        %2373 = vmatprep.subr.mxu0 0.0
        %2374 = vmatpush2.msra.mxu0 0.0
        %2375 = vmatprep.subr.mxu0 0.0
        %2376 = vmatpush2.msra.mxu0 0.0
        %2377 = vmatprep.subr.mxu0 0.0
        %2378 = vmatpush2.msra.mxu0 0.0
        %2379 = vmatprep.subr.mxu0 0.0
        %2380 = vmatpush2.msra.mxu0 0.0
        %2381 = vmatprep.mubr.f32.mxu0 0.0
        %2382 = vmatmul.mubr.f32.gmra.mxu0 %v2315
        %v2383 = vpop.f32.mrf.mxu0
        %v2384 = vadd.f32 0.0, %v2383
        %v2385 = vpop.f32.mrf.mxu0
        %2386 = vdwg.mxu0
        %v2387 = vadd.f32 %v1901, %v2384
        %v2388 = vld [vmem:[%s11] sm:$0x1]
        %v2390 = vlaneseq
        %v2391 = vshrl.u32 %v2390, 7
        %v2392 = vsub.s32 0, %v2391
        %v2393 = vrot.slane %v2388, %v2392
        %v2395 = vadd.f32 %v2387, %v2393
        %v2396 = vld [vmem:[%s12] sm:$0x1]
        %v2398 = vlaneseq
        %v2399 = vshrl.u32 %v2398, 7
        %v2400 = vsub.s32 0, %v2399
        %v2401 = vrot.slane %v2396, %v2400
        %v2403 = vmul.f32 %v2395, %v2401
        %v2404 = vstv %s416
        %v2405 = vmul.f32 %v2404, %v2403
        %v2406 = vadd.f32 %v417, %v2405
        %2407 = vst.msk [vmem:[%s411] sm:$0xff] %vm418, %v2406
        %s2408 = sand.u32 %s298, 1
        %s2409 = scalar_lea.sflag [#allocation5], %s2408
        %s2410 = sand.u32 %s298, 1
        %s2411 = smul.addr %s2410, 8
        %s2412 = scalar_lea.vmem [#allocation4], %s2411
        // Predicated region
        $region69: #{tpu_custom_call.1} parent=67 // pred_check
          %p2413 = pneg %p308
        $region70: #{tpu_custom_call.1} parent=67 // pred_check_branch
          %2415 = sbr.rel (%p2413) target = $region72
        $region71: #{tpu_custom_call.1} parent=67 // pred_region
          %s2417 = ssub.s32 128, 128
          %2418 = vsyncadd %s2409, %s2417
          %s2419 = smul.addr %s33, 128
          %s2420 = scalar_lea.hbm %s13, %s2419
          %s2422 = sshll.u32 %s2412, 4
          %s2423 = int_to_ptr.vmem [resolvable:$true] %s2422
          %2425 = dma.vmem_to_hbm [thread:$0]  %s2423, 128, %s2420, %s2409
        $region72: #{tpu_custom_call.1} parent=67 // pred_fallthru
          _
      $region68: #{tpu_custom_call.1} parent=5 // pred_fallthru
        _
      %p2426 = scmp.le.s32.totalorder 2, %s28
      // Predicated region
      $region73: #{tpu_custom_call.1} parent=5 // pred_check
        %p2427 = pneg %p2426
      $region74: #{tpu_custom_call.1} parent=5 // pred_check_branch
        %2429 = sbr.rel (%p2427) target = $region76
      $region75: #{tpu_custom_call.1} parent=5 // pred_region
        %s2430 = ssub.s32 %s28, 2
        // Predicated region
        $region77: #{tpu_custom_call.1} parent=75 // pred_check
          %p2431 = pneg %p314
        $region78: #{tpu_custom_call.1} parent=75 // pred_check_branch
          %2433 = sbr.rel (%p2431) target = $region80
        $region79: #{tpu_custom_call.1} parent=75 // pred_region
          %s2434 = sand.u32 %s299, 1
          %s2435 = scalar_lea.sflag [#allocation5], %s2434
          %s2436 = sand.u32 %s299, 1
          %s2437 = smul.addr %s2436, 8
          %s2438 = scalar_lea.vmem [#allocation4], %s2437
          %2439 = dma.done %s2435, 128
        $region80: #{tpu_custom_call.1} parent=75 // pred_fallthru
          _
      $region76: #{tpu_custom_call.1} parent=5 // pred_fallthru
        _
    $region6: #{tpu_custom_call.1} parent=1 // loop_footer
      %s32 = sadd.s32 1, %s28
    $region7: #{tpu_custom_call.1} parent=1 // loop_footer_branch
      %27 = sbr.rel target = $region3
    $region8: #{tpu_custom_call.1} parent=1 // loop_exit
      _
    %2440 = vsyncpa [#allocation5], 1
    %s2441 = scalar_lea.sflag [#allocation5], 1
    %2442 = vsyncpa %s2441, 1

</llo_original>
